<compile_context>
chip_gen: v6e
topology: v6e:2x2x1
jax: 0.10.0
libtpu: 0.0.40
codegen_flags: <defaults>
</compile_context>

<pallas_src>
import functools

import jax
import jax.numpy as jnp
from jax.experimental import pallas as pl
from jax.experimental.pallas import tpu as pltpu

BN_EPS = 1e-5
FOUT = 128  # zero-extended hidden feature width (sublane axis)


def _round_up(x, m):
    return ((x + m - 1) // m) * m


def critic_kernel(sa_ref, wa_ref, wb_ref, out_ref):
    """One independent critic forward (one BN problem), feature-major.

    sa_ref : (1, FIN, B)  packed [state; action; pad], features on sublanes
    wa_ref : (3*FOUT, FIN) resident: [W1_ext ; W2_action_ext ; vec columns]
    wb_ref : (FOUT, FOUT)  resident: W2_x1_ext
    out_ref: (1, 1, B)     lane-dense q-values
    """
    F = FOUT
    sa = sa_ref[0]                                            # (FIN, B)

    # lin1(state) and lin2's action contribution share the packed input ->
    # one MXU matmul for both.  Biases dropped (cancel under training BN).
    h12 = jnp.dot(wa_ref[0:2 * F, :], sa,
                  preferred_element_type=jnp.float32)         # (2F, B)
    h1, h2b = h12[0:F], h12[F:2 * F]                          # (F, B) each

    vec = wa_ref[2 * F:3 * F, :]                              # (F, FIN) columns
    g1, be1 = vec[:, 0:1], vec[:, 1:2]
    g2, be2 = vec[:, 2:3], vec[:, 3:4]
    w3, b3 = vec[:, 4:5], vec[0:1, 5:6]

    # bn1 (training-mode batch stats over the lane/batch axis) + relu,
    # folded to a single FMA per element.  Padded feature rows have h=0 and
    # gamma=0 -> stay exactly zero through relu.
    mu = jnp.mean(h1, axis=1, keepdims=True)
    var = jnp.maximum(jnp.mean(h1 * h1, axis=1, keepdims=True) - mu * mu, 0.0)
    s = g1 * jax.lax.rsqrt(var + BN_EPS)
    x1 = jnp.maximum(h1 * s + (be1 - mu * s), 0.0)            # (F, B)

    # lin2 on [x1, action] without concat: x1 path + precomputed action path.
    h2 = jnp.dot(wb_ref[...], x1,
                 preferred_element_type=jnp.float32) + h2b    # (F, B)
    mu = jnp.mean(h2, axis=1, keepdims=True)
    var = jnp.maximum(jnp.mean(h2 * h2, axis=1, keepdims=True) - mu * mu, 0.0)
    s = g2 * jax.lax.rsqrt(var + BN_EPS)
    x2 = jnp.maximum(h2 * s + (be2 - mu * s), 0.0)            # (F, B)

    # lin3: per-feature weight column + sublane reduce -> lane-dense (1, B).
    out_ref[0] = jnp.sum(x2 * w3, axis=0, keepdims=True) + b3


def prepare_params(p):
    """Pack all parameters into two blocks for the feature-major kernel.

    wp_a : (3*FOUT, FIN) f32
        rows [0,   FOUT): lin1.weight (out,in) at [0:h1, 0:ds]
        rows [FOUT,2F)  : lin2.weight action columns at [0:n2, ds:ds+da]
        rows [2F, 3F)   : per-feature vectors stored as lane columns:
            lane 0 bn1.gamma, 1 bn1.beta, 2 bn2.gamma, 3 bn2.beta,
            lane 4 lin3.weight, lane 5 (row 0) lin3.bias
    wp_b : (FOUT, FOUT) f32 : lin2.weight x1 columns at [0:n2, 0:h1]
    lin1/lin2 biases are intentionally dropped (cancel in training-mode BN).
    """
    w1 = p["lin1.weight"]                     # (h1, ds)
    w2 = p["lin2.weight"]                     # (n2, h1 + da)
    w3 = p["lin3.weight"]                     # (1, n2)
    h1, ds = w1.shape
    n2 = w2.shape[0]
    da = w2.shape[1] - h1
    assert h1 <= FOUT and n2 <= FOUT
    fin = max(8, _round_up(ds + da, 8))
    assert fin >= 6                           # vec columns live in lanes 0..5

    wp_a = jnp.zeros((3 * FOUT, fin), jnp.float32)
    wp_a = wp_a.at[0:h1, 0:ds].set(w1)
    wp_a = wp_a.at[FOUT:FOUT + n2, ds:ds + da].set(w2[:, h1:])
    v0 = 2 * FOUT
    wp_a = wp_a.at[v0:v0 + h1, 0].set(p["bn1.gamma"])
    wp_a = wp_a.at[v0:v0 + h1, 1].set(p["bn1.beta"])
    wp_a = wp_a.at[v0:v0 + n2, 2].set(p["bn2.gamma"])
    wp_a = wp_a.at[v0:v0 + n2, 3].set(p["bn2.beta"])
    wp_a = wp_a.at[v0:v0 + n2, 4].set(w3[0])
    wp_a = wp_a.at[v0, 5].set(p["lin3.bias"][0])

    wp_b = jnp.zeros((FOUT, FOUT), jnp.float32)
    wp_b = wp_b.at[0:n2, 0:h1].set(w2[:, :h1])
    return wp_a, wp_b


def critic_forward(state, action, wp_a, wp_b):
    """state: (G, B, dim_state), action: (G, B, dim_action) -> (G, 1, B).

    Each group g is one independent module forward (its own BatchNorm batch
    statistics).  The grid amortizes the pallas_call / DMA prologue across
    groups; the packed weight blocks have constant index_maps so they are
    DMA'd once and stay VMEM-resident; the grid axis is "parallel" for v7x.
    """
    G, B, ds = state.shape
    da = action.shape[-1]
    fin = wp_a.shape[-1]
    nra = wp_a.shape[0]

    # Pack [state, action] into one feature-major input slab (layout plumbing
    # done in the wrapper; a real training loop would store the batch this way).
    sa = jnp.concatenate([state, action], axis=-1)        # (G, B, ds+da)
    sa = jnp.swapaxes(sa, 1, 2)                           # (G, ds+da, B)
    sa = jnp.pad(sa, ((0, 0), (0, fin - ds - da), (0, 0)))

    return pl.pallas_call(
        critic_kernel,
        out_shape=jax.ShapeDtypeStruct((G, 1, B), jnp.float32),
        grid=(G,),
        in_specs=[
            pl.BlockSpec((1, fin, B), lambda g: (g, 0, 0)),
            pl.BlockSpec((nra, fin), lambda g: (0, 0)),    # resident weights
            pl.BlockSpec((FOUT, FOUT), lambda g: (0, 0)),  # resident weights
        ],
        out_specs=pl.BlockSpec((1, 1, B), lambda g: (g, 0, 0)),
        compiler_params=pltpu.CompilerParams(
            dimension_semantics=("parallel",)),
    )(sa, wp_a, wp_b)


def critic_apply(state, action, wp_a, wp_b):
    """Original module signature: state (B, ds), action (B, da) -> (B, 1)."""
    q = critic_forward(state[None], action[None], wp_a, wp_b)   # (1, 1, B)
    return q[0, 0, :, None]


def init_params(key, dim_state, dim_action, critic_node):
    """PyTorch-style init: Linear U(-1/sqrt(fan_in), 1/sqrt(fan_in)) in native
    (out, in) layout; BatchNorm gamma=1, beta=0."""
    h1 = critic_node - dim_action
    ks = jax.random.split(key, 6)

    def linear(kw, kb, fan_in, fan_out):
        bound = 1.0 / jnp.sqrt(float(fan_in))
        w = jax.random.uniform(kw, (fan_out, fan_in), jnp.float32, -bound, bound)
        b = jax.random.uniform(kb, (fan_out,), jnp.float32, -bound, bound)
        return w, b

    w1, b1 = linear(ks[0], ks[1], dim_state, h1)
    w2, b2 = linear(ks[2], ks[3], critic_node, critic_node)
    w3, b3 = linear(ks[4], ks[5], critic_node, 1)
    return {
        "lin1.weight": w1, "lin1.bias": b1,
        "lin2.weight": w2, "lin2.bias": b2,
        "lin3.weight": w3, "lin3.bias": b3,
        "bn1.gamma": jnp.ones((h1,), jnp.float32),
        "bn1.beta": jnp.zeros((h1,), jnp.float32),
        "bn2.gamma": jnp.ones((critic_node,), jnp.float32),
        "bn2.beta": jnp.zeros((critic_node,), jnp.float32),
    }


def critic_ref(state, action, p):
    """Pure-JAX reference of the PyTorch forward (training-mode BN, concat,
    biases included -- they cancel inside BN, proving the kernel's drop)."""
    def bn(x, g, b):
        m = jnp.mean(x, axis=0, keepdims=True)
        v = jnp.mean((x - m) ** 2, axis=0, keepdims=True)     # biased variance
        return g[None, :] * (x - m) / jnp.sqrt(v + BN_EPS) + b[None, :]

    x1 = jax.nn.relu(bn(state @ p["lin1.weight"].T + p["lin1.bias"],
                        p["bn1.gamma"], p["bn1.beta"]))
    x_cat = jnp.concatenate([x1, action], axis=1)
    x2 = jax.nn.relu(bn(x_cat @ p["lin2.weight"].T + p["lin2.bias"],
                        p["bn2.gamma"], p["bn2.beta"]))
    return x2 @ p["lin3.weight"].T + p["lin3.bias"]


if __name__ == "__main__":
    # cfg: dim_state=8, dim_action=4, critic_node=32; 4 independent minibatches
    # of batch=8 behind one gridded pallas_call.
    dim_state, dim_action, critic_node = 8, 4, 32
    batch, groups = 8, 4

    key = jax.random.PRNGKey(0)
    k_state, k_action, k_params = jax.random.split(key, 3)
    state = jax.random.normal(k_state, (groups, batch, dim_state), jnp.float32)
    action = jax.random.normal(k_action, (groups, batch, dim_action), jnp.float32)
    params = init_params(k_params, dim_state, dim_action, critic_node)
    wp_a, wp_b = prepare_params(params)

    out = jax.block_until_ready(critic_forward(state, action, wp_a, wp_b))
    assert out.shape == (groups, 1, batch)

    ref = jnp.stack([critic_ref(state[g], action[g], params)[:, 0]
                     for g in range(groups)])[:, None, :]
    assert jnp.allclose(out, ref, atol=1e-4, rtol=1e-4), \
        float(jnp.max(jnp.abs(out - ref)))

    # Single forward matching the original module signature -> (B, 1).
    q = jax.block_until_ready(critic_apply(state[0], action[0], wp_a, wp_b))
    assert q.shape == (batch, 1)
    assert jnp.allclose(q, critic_ref(state[0], action[0], params),
                        atol=1e-4, rtol=1e-4)
    print("KERNEL_OK")
</pallas_src>

<mosaic_0001>
module attributes {stable_mosaic.version = 11 : i64} {
  func.func @critic_kernel(%arg0: i32, %arg1: memref<1x16x8xf32, #tpu.memory_space<vmem>>, %arg2: memref<384x16xf32, #tpu.memory_space<vmem>>, %arg3: memref<128x128xf32, #tpu.memory_space<vmem>>, %arg4: memref<1x1x8xf32, #tpu.memory_space<vmem>>) attributes {dimension_semantics = [#tpu.dimension_semantics<parallel>], iteration_bounds = array<i64: 4>, scalar_prefetch = 0 : i64, scratch_operands = 0 : i64, tpu.core_type = #tpu.core_type<tc>, window_params = [{transform_indices = @transform_0, window_bounds = array<i64: 1, 16, 8>}, {pipeline_mode = #tpu.pipeline_mode<synchronous>, transform_indices = @transform_1, window_bounds = array<i64: 384, 16>}, {pipeline_mode = #tpu.pipeline_mode<synchronous>, transform_indices = @transform_2, window_bounds = array<i64: 128, 128>}, {transform_indices = @transform_3, window_bounds = array<i64: 1, 1, 8>}]} {
    %c0 = arith.constant 0 : index
    %c0_0 = arith.constant 0 : index
    %c0_1 = arith.constant 0 : index
    %0 = vector.load %arg1[%c0, %c0_0, %c0_1] : memref<1x16x8xf32, #tpu.memory_space<vmem>>, vector<1x16x8xf32>
    %1 = vector.shape_cast %0 : vector<1x16x8xf32> to vector<16x8xf32>
    %c0_2 = arith.constant 0 : index
    %c0_3 = arith.constant 0 : index
    %2 = vector.load %arg2[%c0_2, %c0_3] : memref<384x16xf32, #tpu.memory_space<vmem>>, vector<256x16xf32>
    %cst = arith.constant dense<0.000000e+00> : vector<256x8xf32>
    %3 = tpu.matmul %2, %1, %cst {dimension_numbers = #tpu.dot_dimension_numbers<[1], [0], [0], [1], [0, 0, 1, 1], [], []>} : vector<256x16xf32>, vector<16x8xf32>, vector<256x8xf32> -> vector<256x8xf32>
    %4 = vector.extract_strided_slice %3 {offsets = [0, 0], sizes = [128, 8], strides = [1, 1]} : vector<256x8xf32> to vector<128x8xf32>
    %5 = vector.extract_strided_slice %3 {offsets = [128, 0], sizes = [128, 8], strides = [1, 1]} : vector<256x8xf32> to vector<128x8xf32>
    %c256 = arith.constant 256 : index
    %c0_4 = arith.constant 0 : index
    %6 = vector.load %arg2[%c256, %c0_4] : memref<384x16xf32, #tpu.memory_space<vmem>>, vector<128x16xf32>
    %7 = vector.extract_strided_slice %6 {offsets = [0, 0], sizes = [128, 1], strides = [1, 1]} : vector<128x16xf32> to vector<128x1xf32>
    %8 = vector.extract_strided_slice %6 {offsets = [0, 1], sizes = [128, 1], strides = [1, 1]} : vector<128x16xf32> to vector<128x1xf32>
    %9 = vector.extract_strided_slice %6 {offsets = [0, 2], sizes = [128, 1], strides = [1, 1]} : vector<128x16xf32> to vector<128x1xf32>
    %10 = vector.extract_strided_slice %6 {offsets = [0, 3], sizes = [128, 1], strides = [1, 1]} : vector<128x16xf32> to vector<128x1xf32>
    %11 = vector.extract_strided_slice %6 {offsets = [0, 4], sizes = [128, 1], strides = [1, 1]} : vector<128x16xf32> to vector<128x1xf32>
    %12 = vector.extract_strided_slice %6 {offsets = [0, 5], sizes = [1, 1], strides = [1, 1]} : vector<128x16xf32> to vector<1x1xf32>
    %cst_5 = arith.constant dense<0.000000e+00> : vector<128xf32>
    %13 = vector.multi_reduction <add>, %4, %cst_5 [1] : vector<128x8xf32> to vector<128xf32>
    %14 = vector.shape_cast %13 : vector<128xf32> to vector<128x1xf32>
    %cst_6 = arith.constant 8.000000e+00 : f32
    %15 = vector.broadcast %cst_6 : f32 to vector<128x1xf32>
    %16 = arith.divf %14, %15 : vector<128x1xf32>
    %17 = arith.mulf %4, %4 : vector<128x8xf32>
    %cst_7 = arith.constant dense<0.000000e+00> : vector<128xf32>
    %18 = vector.multi_reduction <add>, %17, %cst_7 [1] : vector<128x8xf32> to vector<128xf32>
    %19 = vector.shape_cast %18 : vector<128xf32> to vector<128x1xf32>
    %cst_8 = arith.constant 8.000000e+00 : f32
    %20 = vector.broadcast %cst_8 : f32 to vector<128x1xf32>
    %21 = arith.divf %19, %20 : vector<128x1xf32>
    %22 = arith.mulf %16, %16 : vector<128x1xf32>
    %23 = arith.subf %21, %22 : vector<128x1xf32>
    %cst_9 = arith.constant 0.000000e+00 : f32
    %24 = vector.broadcast %cst_9 : f32 to vector<128x1xf32>
    %25 = arith.maximumf %23, %24 : vector<128x1xf32>
    %cst_10 = arith.constant 9.99999974E-6 : f32
    %26 = vector.broadcast %cst_10 : f32 to vector<128x1xf32>
    %27 = arith.addf %25, %26 : vector<128x1xf32>
    %28 = math.rsqrt %27 : vector<128x1xf32>
    %29 = arith.mulf %7, %28 : vector<128x1xf32>
    %30 = vector.broadcast %29 : vector<128x1xf32> to vector<128x8xf32>
    %31 = arith.mulf %4, %30 : vector<128x8xf32>
    %32 = arith.mulf %16, %29 : vector<128x1xf32>
    %33 = arith.subf %8, %32 : vector<128x1xf32>
    %34 = vector.broadcast %33 : vector<128x1xf32> to vector<128x8xf32>
    %35 = arith.addf %31, %34 : vector<128x8xf32>
    %cst_11 = arith.constant 0.000000e+00 : f32
    %36 = vector.broadcast %cst_11 : f32 to vector<128x8xf32>
    %37 = arith.maximumf %35, %36 : vector<128x8xf32>
    %c0_12 = arith.constant 0 : index
    %c0_13 = arith.constant 0 : index
    %38 = vector.load %arg3[%c0_12, %c0_13] : memref<128x128xf32, #tpu.memory_space<vmem>>, vector<128x128xf32>
    %cst_14 = arith.constant dense<0.000000e+00> : vector<128x8xf32>
    %39 = tpu.matmul %38, %37, %cst_14 {dimension_numbers = #tpu.dot_dimension_numbers<[1], [0], [0], [1], [0, 0, 1, 1], [], []>} : vector<128x128xf32>, vector<128x8xf32>, vector<128x8xf32> -> vector<128x8xf32>
    %40 = arith.addf %39, %5 : vector<128x8xf32>
    %cst_15 = arith.constant dense<0.000000e+00> : vector<128xf32>
    %41 = vector.multi_reduction <add>, %40, %cst_15 [1] : vector<128x8xf32> to vector<128xf32>
    %42 = vector.shape_cast %41 : vector<128xf32> to vector<128x1xf32>
    %cst_16 = arith.constant 8.000000e+00 : f32
    %43 = vector.broadcast %cst_16 : f32 to vector<128x1xf32>
    %44 = arith.divf %42, %43 : vector<128x1xf32>
    %45 = arith.mulf %40, %40 : vector<128x8xf32>
    %cst_17 = arith.constant dense<0.000000e+00> : vector<128xf32>
    %46 = vector.multi_reduction <add>, %45, %cst_17 [1] : vector<128x8xf32> to vector<128xf32>
    %47 = vector.shape_cast %46 : vector<128xf32> to vector<128x1xf32>
    %cst_18 = arith.constant 8.000000e+00 : f32
    %48 = vector.broadcast %cst_18 : f32 to vector<128x1xf32>
    %49 = arith.divf %47, %48 : vector<128x1xf32>
    %50 = arith.mulf %44, %44 : vector<128x1xf32>
    %51 = arith.subf %49, %50 : vector<128x1xf32>
    %cst_19 = arith.constant 0.000000e+00 : f32
    %52 = vector.broadcast %cst_19 : f32 to vector<128x1xf32>
    %53 = arith.maximumf %51, %52 : vector<128x1xf32>
    %cst_20 = arith.constant 9.99999974E-6 : f32
    %54 = vector.broadcast %cst_20 : f32 to vector<128x1xf32>
    %55 = arith.addf %53, %54 : vector<128x1xf32>
    %56 = math.rsqrt %55 : vector<128x1xf32>
    %57 = arith.mulf %9, %56 : vector<128x1xf32>
    %58 = vector.broadcast %57 : vector<128x1xf32> to vector<128x8xf32>
    %59 = arith.mulf %40, %58 : vector<128x8xf32>
    %60 = arith.mulf %44, %57 : vector<128x1xf32>
    %61 = arith.subf %10, %60 : vector<128x1xf32>
    %62 = vector.broadcast %61 : vector<128x1xf32> to vector<128x8xf32>
    %63 = arith.addf %59, %62 : vector<128x8xf32>
    %cst_21 = arith.constant 0.000000e+00 : f32
    %64 = vector.broadcast %cst_21 : f32 to vector<128x8xf32>
    %65 = arith.maximumf %63, %64 : vector<128x8xf32>
    %66 = vector.broadcast %11 : vector<128x1xf32> to vector<128x8xf32>
    %67 = arith.mulf %65, %66 : vector<128x8xf32>
    %cst_22 = arith.constant dense<0.000000e+00> : vector<8xf32>
    %68 = vector.multi_reduction <add>, %67, %cst_22 [0] : vector<128x8xf32> to vector<8xf32>
    %69 = vector.shape_cast %68 : vector<8xf32> to vector<1x8xf32>
    %70 = vector.broadcast %12 : vector<1x1xf32> to vector<1x8xf32>
    %71 = arith.addf %69, %70 : vector<1x8xf32>
    %c0_23 = arith.constant 0 : index
    %c0_24 = arith.constant 0 : index
    %c0_25 = arith.constant 0 : index
    %72 = vector.load %arg4[%c0_23, %c0_24, %c0_25] : memref<1x1x8xf32, #tpu.memory_space<vmem>>, vector<1x1x8xf32>
    %73 = vector.shape_cast %72 : vector<1x1x8xf32> to vector<1x8xf32>
    %74 = vector.shape_cast %71 : vector<1x8xf32> to vector<1x1x8xf32>
    tpu.vector_store %arg4[%c0_23, %c0_24, %c0_25], %74 {strides = array<i32>} : memref<1x1x8xf32, #tpu.memory_space<vmem>>, vector<1x1x8xf32>,
    return
  }
  func.func @transform_0(%arg0: i32) -> (i32, i32, i32) {
    %c0_i32 = arith.constant 0 : i32
    %c0_i32_0 = arith.constant 0 : i32
    %c0_i32_1 = arith.constant 0 : i32
    return %arg0, %c0_i32, %c0_i32_0 : i32, i32, i32
  }
  func.func @transform_1(%arg0: i32) -> (i32, i32) {
    %c0_i32 = arith.constant 0 : i32
    %c0_i32_0 = arith.constant 0 : i32
    %c0_i32_1 = arith.constant 0 : i32
    return %c0_i32, %c0_i32_0 : i32, i32
  }
  func.func @transform_2(%arg0: i32) -> (i32, i32) {
    %c0_i32 = arith.constant 0 : i32
    %c0_i32_0 = arith.constant 0 : i32
    %c0_i32_1 = arith.constant 0 : i32
    return %c0_i32, %c0_i32_0 : i32, i32
  }
  func.func @transform_3(%arg0: i32) -> (i32, i32, i32) {
    %c0_i32 = arith.constant 0 : i32
    %c0_i32_0 = arith.constant 0 : i32
    %c0_i32_1 = arith.constant 0 : i32
    return %arg0, %c0_i32, %c0_i32_0 : i32, i32, i32
  }
}

</mosaic_0001>

<llo_original>
// kernel: tpu_custom_call.1
$region0: #{tpu_custom_call.1}
  #allocation0 [shape = 'u32[]', space=smem, size = 0x4, offset = 0x4, fixed_abs, tag = 'smem constant byte address 0x4 - core index']
  #allocation1 [shape = 'u32[144,128]{1,0:T(1,128)}', space=vmem, size = 0x12000, scoped, tag = 'internal scratch']
  %s0 = inlined_call_operand.vmem [shape: f32[4,16,8], index: 0, kind: input, shape index: {}]
  %s1 = inlined_call_operand.vmem [shape: f32[384,16], index: 1, kind: input, shape index: {}]
  %s2 = inlined_call_operand.vmem [shape: f32[128,128], index: 2, kind: input, shape index: {}]
  %s3 = inlined_call_operand.hbm [shape: f32[4,1,8], index: 3, kind: output, shape index: {}]
  %s4 = sld [smem:[#allocation0]]
  $region45: #{tpu_custom_call.1} parent=0
    _
  %s6 = ssub.s32 1, %s4
  %s7 = scalar_select 0, %s6, %s4
  $region1: #{tpu_custom_call.1} parent=0
    #allocation2 [shape = 'u8[1024]{0}', space=vmem, size = 0x400, scoped, tag = 'output window, operand 0']
    #allocation3 [shape = 's32[2]{0}', space=sflag, size = 0x8, scoped, tag = 'scoped memory for tpu_custom_call.1']
    %8 = vsyncpa [#allocation3], 0
    %s9 = scalar_lea.sflag [#allocation3], 1
    %10 = vsyncpa %s9, 0
    loop: start=0, step=1, limit=6
    $region2: #{tpu_custom_call.1} parent=1 // loop_pre_header
      _
    $region3: #{tpu_custom_call.1} parent=1 // loop_header
      %s12 = sphi 0, %s16
      %p13 = scmp.ge.s32.totalorder %s12, 6
      %s22 = sphi 0, %s24
      %s25 = sphi 0, %s22
      %s26 = sphi 0, %s25
      %s42 = sphi 0, %s26
      %s46 = sphi 0, %s46
      %s48 = sphi 0, %s46
      %s49 = sphi 0, %s48
      %s63 = sphi 0, %s49
      %s67 = sphi 0, %s67
      %s69 = sphi 0, %s67
      %s70 = sphi 0, %s69
      %s84 = sphi 0, %s70
      %s90 = sphi 0, %s92
      %s93 = sphi 0, %s90
      %s94 = sphi 0, %s93
      %s110 = sphi 0, %s94
    $region4: #{tpu_custom_call.1} parent=1 // loop_header_branch
      %15 = sbr.rel (%p13) target = $region8
    $region5: #{tpu_custom_call.1} parent=1 // loop_body
      %s17 = ssub.s32 %s12, 1
      %s18 = ssub.s32 %s12, 2
      %s19 = sadd.s32 %s12, 1
      %s20 = ssub.s32 %s12, %s19
      %p21 = scmp.eq.s32.totalorder %s20, 0
      %s23 = sadd.s32 %s22, 1
      %s24 = scalar_select %p21, %s22, %s23
      %p27 = pneg %p21
      %p28 = scmp.eq.s32.totalorder %s12, 3
      %p29 = por %p27, %p28
      %p30 = scmp.ne.s32.totalorder %s22, %s25
      %p31 = scmp.eq.s32.totalorder %s12, 0
      %p32 = por %p30, %p31
      %p33 = scmp.ne.s32.totalorder %s22, %s25
      %p34 = scmp.eq.s32.totalorder %s17, 3
      %p35 = por %p33, %p34
      %p36 = scmp.ne.s32.totalorder %s25, %s26
      %p37 = scmp.eq.s32.totalorder %s17, 0
      %p38 = por %p36, %p37
      %p39 = scmp.ne.s32.totalorder %s25, %s26
      %p40 = scmp.eq.s32.totalorder %s18, 3
      %p41 = por %p39, %p40
      %p43 = scmp.ne.s32.totalorder %s26, %s42
      %p44 = scmp.eq.s32.totalorder %s18, 0
      %p45 = por %p43, %p44
      %s47 = sadd.s32 %s46, 1
      %p50 = scmp.eq.s32.totalorder %s12, 3
      %p51 = scmp.ne.s32.totalorder %s46, %s48
      %p52 = scmp.eq.s32.totalorder %s12, 0
      %p53 = por %p51, %p52
      %p54 = scmp.ne.s32.totalorder %s46, %s48
      %p55 = scmp.eq.s32.totalorder %s17, 3
      %p56 = por %p54, %p55
      %p57 = scmp.ne.s32.totalorder %s48, %s49
      %p58 = scmp.eq.s32.totalorder %s17, 0
      %p59 = por %p57, %p58
      %p60 = scmp.ne.s32.totalorder %s48, %s49
      %p61 = scmp.eq.s32.totalorder %s18, 3
      %p62 = por %p60, %p61
      %p64 = scmp.ne.s32.totalorder %s49, %s63
      %p65 = scmp.eq.s32.totalorder %s18, 0
      %p66 = por %p64, %p65
      %s68 = sadd.s32 %s67, 1
      %p71 = scmp.eq.s32.totalorder %s12, 3
      %p72 = scmp.ne.s32.totalorder %s67, %s69
      %p73 = scmp.eq.s32.totalorder %s12, 0
      %p74 = por %p72, %p73
      %p75 = scmp.ne.s32.totalorder %s67, %s69
      %p76 = scmp.eq.s32.totalorder %s17, 3
      %p77 = por %p75, %p76
      %p78 = scmp.ne.s32.totalorder %s69, %s70
      %p79 = scmp.eq.s32.totalorder %s17, 0
      %p80 = por %p78, %p79
      %p81 = scmp.ne.s32.totalorder %s69, %s70
      %p82 = scmp.eq.s32.totalorder %s18, 3
      %p83 = por %p81, %p82
      %p85 = scmp.ne.s32.totalorder %s70, %s84
      %p86 = scmp.eq.s32.totalorder %s18, 0
      %p87 = por %p85, %p86
      %s88 = ssub.s32 %s12, %s19
      %p89 = scmp.eq.s32.totalorder %s88, 0
      %s91 = sadd.s32 %s90, 1
      %s92 = scalar_select %p89, %s90, %s91
      %p95 = pneg %p89
      %p96 = scmp.eq.s32.totalorder %s12, 3
      %p97 = por %p95, %p96
      %p98 = scmp.ne.s32.totalorder %s90, %s93
      %p99 = scmp.eq.s32.totalorder %s12, 0
      %p100 = por %p98, %p99
      %p101 = scmp.ne.s32.totalorder %s90, %s93
      %p102 = scmp.eq.s32.totalorder %s17, 3
      %p103 = por %p101, %p102
      %p104 = scmp.ne.s32.totalorder %s93, %s94
      %p105 = scmp.eq.s32.totalorder %s17, 0
      %p106 = por %p104, %p105
      %p107 = scmp.ne.s32.totalorder %s93, %s94
      %p108 = scmp.eq.s32.totalorder %s18, 3
      %p109 = por %p107, %p108
      %p111 = scmp.ne.s32.totalorder %s94, %s110
      %p112 = scmp.eq.s32.totalorder %s18, 0
      %p113 = por %p111, %p112
      %p114 = scmp.le.s32.totalorder 1, %s12
      %p115 = scmp.lt.s32.totalorder %s12, 5
      %p116 = pnand %p114, %p115
      %p117 = pneg %p116
      // Predicated region
      $region9: #{tpu_custom_call.1} parent=5 // pred_check
        _
      $region10: #{tpu_custom_call.1} parent=5 // pred_check_branch
        %119 = sbr.rel (%p116) target = $region12
      $region11: #{tpu_custom_call.1} parent=5 // pred_region
        %s120 = ssub.s32 %s12, 1
        // Predicated region
        $region13: #{tpu_custom_call.1} parent=11 // pred_check
          %p121 = pneg %p59
        $region14: #{tpu_custom_call.1} parent=11 // pred_check_branch
          %123 = sbr.rel (%p121) target = $region16
        $region15: #{tpu_custom_call.1} parent=11 // pred_region
          _
        $region16: #{tpu_custom_call.1} parent=11 // pred_fallthru
          _
        // Predicated region
        $region17: #{tpu_custom_call.1} parent=11 // pred_check
          %p124 = pneg %p80
        $region18: #{tpu_custom_call.1} parent=11 // pred_check_branch
          %126 = sbr.rel (%p124) target = $region20
        $region19: #{tpu_custom_call.1} parent=11 // pred_region
          _
        $region20: #{tpu_custom_call.1} parent=11 // pred_fallthru
          _
      $region12: #{tpu_custom_call.1} parent=5 // pred_fallthru
        _
      %p127 = scmp.lt.s32.totalorder %s12, 4
      // Predicated region
      $region21: #{tpu_custom_call.1} parent=5 // pred_check
        %p128 = pneg %p127
      $region22: #{tpu_custom_call.1} parent=5 // pred_check_branch
        %130 = sbr.rel (%p128) target = $region24
      $region23: #{tpu_custom_call.1} parent=5 // pred_region
        // Predicated region
        $region25: #{tpu_custom_call.1} parent=23 // pred_check
          %p131 = pneg %p32
        $region26: #{tpu_custom_call.1} parent=23 // pred_check_branch
          %133 = sbr.rel (%p131) target = $region28
        $region27: #{tpu_custom_call.1} parent=23 // pred_region
          %p134 = scmp.lt.s32.totalorder %s12, 3
          %s135 = scalar_select %p134, %s12, 3
          %s136 = smul.addr %s135, 2
          %s137 = smul.addr %s136, 8
          %s138 = scalar_lea.vmem %s0, %s137
        $region28: #{tpu_custom_call.1} parent=23 // pred_fallthru
          _
      $region24: #{tpu_custom_call.1} parent=5 // pred_fallthru
        _
      %p139 = scmp.le.s32.totalorder 1, %s12
      %p140 = scmp.lt.s32.totalorder %s12, 5
      %p141 = pnand %p139, %p140
      %p142 = pneg %p141
      // Predicated region
      $region29: #{tpu_custom_call.1} parent=5 // pred_check
        _
      $region30: #{tpu_custom_call.1} parent=5 // pred_check_branch
        %144 = sbr.rel (%p141) target = $region32
      $region31: #{tpu_custom_call.1} parent=5 // pred_region
        %s145 = ssub.s32 %s12, 1
        %p146 = scmp.lt.s32.totalorder %s17, 3
        %s147 = scalar_select %p146, %s17, 3
        %s148 = smul.addr %s147, 2
        %s149 = smul.addr %s148, 8
        %s150 = scalar_lea.vmem %s0, %s149
        %p151 = pneg %p38
        %p152 = pneg %p35
        %p153 = pneg %p59
        %p154 = pneg %p56
        %p155 = pneg %p80
        %p156 = pneg %p77
        %p157 = pneg %p106
        %p158 = pneg %p103
        %s159 = sand.u32 %s93, 1
        %s160 = scalar_lea.sflag [#allocation3], %s159
        %s161 = sand.u32 %s93, 1
        %s162 = scalar_lea.vmem [#allocation2], %s161
        %p163 = scmp.lt.s32.totalorder %s17, 3
        %s164 = scalar_select %p163, %s17, 3
        %s165 = smul.addr %s164, 2
        %s166 = smul.addr %s165, 8
        %s167 = scalar_lea.vmem %s0, %s166
        %v168 = vld [vmem:[%s167] sm:$0xff]
        %v169 = vld [vmem:[%s167 + $0x8] sm:$0xff]
        %v170 = vld [vmem:[%s1] sm:$0xff]
        %v171 = vld [vmem:[%s1 + $0x8] sm:$0xff]
        %v172 = vld [vmem:[%s1 + $0x10] sm:$0xff]
        %v173 = vld [vmem:[%s1 + $0x18] sm:$0xff]
        %v174 = vld [vmem:[%s1 + $0x20] sm:$0xff]
        %v175 = vld [vmem:[%s1 + $0x28] sm:$0xff]
        %v176 = vld [vmem:[%s1 + $0x30] sm:$0xff]
        %v177 = vld [vmem:[%s1 + $0x38] sm:$0xff]
        %v178 = vld [vmem:[%s1 + $0x40] sm:$0xff]
        %v179 = vld [vmem:[%s1 + $0x48] sm:$0xff]
        %v180 = vld [vmem:[%s1 + $0x50] sm:$0xff]
        %v181 = vld [vmem:[%s1 + $0x58] sm:$0xff]
        %v182 = vld [vmem:[%s1 + $0x60] sm:$0xff]
        %v183 = vld [vmem:[%s1 + $0x68] sm:$0xff]
        %v184 = vld [vmem:[%s1 + $0x70] sm:$0xff]
        %v185 = vld [vmem:[%s1 + $0x78] sm:$0xff]
        %v186 = vld [vmem:[%s1 + $0x80] sm:$0xff]
        %v187 = vld [vmem:[%s1 + $0x88] sm:$0xff]
        %v188 = vld [vmem:[%s1 + $0x90] sm:$0xff]
        %v189 = vld [vmem:[%s1 + $0x98] sm:$0xff]
        %v190 = vld [vmem:[%s1 + $0xa0] sm:$0xff]
        %v191 = vld [vmem:[%s1 + $0xa8] sm:$0xff]
        %v192 = vld [vmem:[%s1 + $0xb0] sm:$0xff]
        %v193 = vld [vmem:[%s1 + $0xb8] sm:$0xff]
        %v194 = vld [vmem:[%s1 + $0xc0] sm:$0xff]
        %v195 = vld [vmem:[%s1 + $0xc8] sm:$0xff]
        %v196 = vld [vmem:[%s1 + $0xd0] sm:$0xff]
        %v197 = vld [vmem:[%s1 + $0xd8] sm:$0xff]
        %v198 = vld [vmem:[%s1 + $0xe0] sm:$0xff]
        %v199 = vld [vmem:[%s1 + $0xe8] sm:$0xff]
        %v200 = vld [vmem:[%s1 + $0xf0] sm:$0xff]
        %v201 = vld [vmem:[%s1 + $0xf8] sm:$0xff]
        %vm202 = vcmask 130048
        %v204 = vsel %vm202, %v170, 0
        %v207 = vsel %vm202, %v171, 0
        %v210 = vsel %vm202, %v172, 0
        %v213 = vsel %vm202, %v173, 0
        %v216 = vsel %vm202, %v174, 0
        %v219 = vsel %vm202, %v175, 0
        %v222 = vsel %vm202, %v176, 0
        %v225 = vsel %vm202, %v177, 0
        %v228 = vsel %vm202, %v178, 0
        %v231 = vsel %vm202, %v179, 0
        %v234 = vsel %vm202, %v180, 0
        %v237 = vsel %vm202, %v181, 0
        %v240 = vsel %vm202, %v182, 0
        %v243 = vsel %vm202, %v183, 0
        %v246 = vsel %vm202, %v184, 0
        %v249 = vsel %vm202, %v185, 0
        %v252 = vsel %vm202, %v186, 0
        %v255 = vsel %vm202, %v187, 0
        %v258 = vsel %vm202, %v188, 0
        %v261 = vsel %vm202, %v189, 0
        %v264 = vsel %vm202, %v190, 0
        %v267 = vsel %vm202, %v191, 0
        %v270 = vsel %vm202, %v192, 0
        %v273 = vsel %vm202, %v193, 0
        %v276 = vsel %vm202, %v194, 0
        %v279 = vsel %vm202, %v195, 0
        %v282 = vsel %vm202, %v196, 0
        %v285 = vsel %vm202, %v197, 0
        %v288 = vsel %vm202, %v198, 0
        %v291 = vsel %vm202, %v199, 0
        %v294 = vsel %vm202, %v200, 0
        %v297 = vsel %vm202, %v201, 0
        %299 = vmatprep.subr.mxu0 0.0
        %300 = vmatpush1.msra.mxu0 0.0
        %301 = vmatprep.subr.mxu0 0.0
        %302 = vmatpush1.msra.mxu0 0.0
        %303 = vmatprep.subr.mxu0 0.0
        %304 = vmatpush1.msra.mxu0 0.0
        %305 = vmatprep.subr.mxu0 0.0
        %306 = vmatpush1.msra.mxu0 0.0
        %307 = vmatprep.subr.mxu0 0.0
        %308 = vmatpush1.msra.mxu0 0.0
        %309 = vmatprep.subr.mxu0 0.0
        %310 = vmatpush1.msra.mxu0 0.0
        %311 = vmatprep.subr.mxu0 0.0
        %312 = vmatpush1.msra.mxu0 0.0
        %313 = vmatprep.subr.mxu0 0.0
        %314 = vmatpush1.msra.mxu0 0.0
        %315 = vmatprep.subr.mxu0 0.0
        %316 = vmatpush1.msra.mxu0 0.0
        %317 = vmatprep.subr.mxu0 0.0
        %318 = vmatpush1.msra.mxu0 0.0
        %319 = vmatprep.subr.mxu0 0.0
        %320 = vmatpush1.msra.mxu0 0.0
        %321 = vmatprep.subr.mxu0 0.0
        %322 = vmatpush1.msra.mxu0 0.0
        %323 = vmatprep.subr.mxu0 0.0
        %324 = vmatpush1.msra.mxu0 0.0
        %325 = vmatprep.subr.mxu0 0.0
        %326 = vmatpush1.msra.mxu0 0.0
        %327 = vmatprep.subr.mxu0 0.0
        %328 = vmatpush1.msra.mxu0 %v169
        %329 = vmatprep.subr.mxu0 0.0
        %330 = vmatpush1.msra.mxu0 %v168
        %331 = vmatprep.subr.mxu0 0.0
        %332 = vmatpush2.msra.mxu0 0.0
        %333 = vmatprep.subr.mxu0 0.0
        %334 = vmatpush2.msra.mxu0 0.0
        %335 = vmatprep.subr.mxu0 0.0
        %336 = vmatpush2.msra.mxu0 0.0
        %337 = vmatprep.subr.mxu0 0.0
        %338 = vmatpush2.msra.mxu0 0.0
        %339 = vmatprep.subr.mxu0 0.0
        %340 = vmatpush2.msra.mxu0 0.0
        %341 = vmatprep.subr.mxu0 0.0
        %342 = vmatpush2.msra.mxu0 0.0
        %343 = vmatprep.subr.mxu0 0.0
        %344 = vmatpush2.msra.mxu0 0.0
        %345 = vmatprep.subr.mxu0 0.0
        %346 = vmatpush2.msra.mxu0 0.0
        %347 = vmatprep.subr.mxu0 0.0
        %348 = vmatpush2.msra.mxu0 0.0
        %349 = vmatprep.subr.mxu0 0.0
        %350 = vmatpush2.msra.mxu0 0.0
        %351 = vmatprep.subr.mxu0 0.0
        %352 = vmatpush2.msra.mxu0 0.0
        %353 = vmatprep.subr.mxu0 0.0
        %354 = vmatpush2.msra.mxu0 0.0
        %355 = vmatprep.subr.mxu0 0.0
        %356 = vmatpush2.msra.mxu0 0.0
        %357 = vmatprep.subr.mxu0 0.0
        %358 = vmatpush2.msra.mxu0 0.0
        %359 = vmatprep.subr.mxu0 0.0
        %360 = vmatpush2.msra.mxu0 0.0
        %361 = vmatprep.subr.mxu0 0.0
        %362 = vmatpush2.msra.mxu0 0.0
        %363 = vmatprep.mubr.f32.mxu0 0.0
        %364 = vmatmul.mubr.f32.gmra.mxu0 %v204
        %v365 = vpop.f32.mrf.mxu0
        %v366 = vadd.f32 0.0, %v365
        %v367 = vpop.f32.mrf.mxu0
        %368 = vmatprep.mubr.f32.mxu0 0.0
        %369 = vmatmul.mubr.f32.gmra.mxu0 %v207
        %v370 = vpop.f32.mrf.mxu0
        %v371 = vadd.f32 0.0, %v370
        %v372 = vpop.f32.mrf.mxu0
        %373 = vmatprep.mubr.f32.mxu0 0.0
        %374 = vmatmul.mubr.f32.gmra.mxu0 %v210
        %v375 = vpop.f32.mrf.mxu0
        %v376 = vadd.f32 0.0, %v375
        %v377 = vpop.f32.mrf.mxu0
        %378 = vmatprep.mubr.f32.mxu0 0.0
        %379 = vmatmul.mubr.f32.gmra.mxu0 %v213
        %v380 = vpop.f32.mrf.mxu0
        %v381 = vadd.f32 0.0, %v380
        %v382 = vpop.f32.mrf.mxu0
        %383 = vmatprep.mubr.f32.mxu0 0.0
        %384 = vmatmul.mubr.f32.gmra.mxu0 %v216
        %v385 = vpop.f32.mrf.mxu0
        %v386 = vadd.f32 0.0, %v385
        %v387 = vpop.f32.mrf.mxu0
        %388 = vmatprep.mubr.f32.mxu0 0.0
        %389 = vmatmul.mubr.f32.gmra.mxu0 %v219
        %v390 = vpop.f32.mrf.mxu0
        %v391 = vadd.f32 0.0, %v390
        %v392 = vpop.f32.mrf.mxu0
        %393 = vmatprep.mubr.f32.mxu0 0.0
        %394 = vmatmul.mubr.f32.gmra.mxu0 %v222
        %v395 = vpop.f32.mrf.mxu0
        %v396 = vadd.f32 0.0, %v395
        %v397 = vpop.f32.mrf.mxu0
        %398 = vmatprep.mubr.f32.mxu0 0.0
        %399 = vmatmul.mubr.f32.gmra.mxu0 %v225
        %v400 = vpop.f32.mrf.mxu0
        %v401 = vadd.f32 0.0, %v400
        %v402 = vpop.f32.mrf.mxu0
        %403 = vmatprep.mubr.f32.mxu0 0.0
        %404 = vmatmul.mubr.f32.gmra.mxu0 %v228
        %v405 = vpop.f32.mrf.mxu0
        %v406 = vadd.f32 0.0, %v405
        %v407 = vpop.f32.mrf.mxu0
        %408 = vmatprep.mubr.f32.mxu0 0.0
        %409 = vmatmul.mubr.f32.gmra.mxu0 %v231
        %v410 = vpop.f32.mrf.mxu0
        %v411 = vadd.f32 0.0, %v410
        %v412 = vpop.f32.mrf.mxu0
        %413 = vmatprep.mubr.f32.mxu0 0.0
        %414 = vmatmul.mubr.f32.gmra.mxu0 %v234
        %v415 = vpop.f32.mrf.mxu0
        %v416 = vadd.f32 0.0, %v415
        %v417 = vpop.f32.mrf.mxu0
        %418 = vmatprep.mubr.f32.mxu0 0.0
        %419 = vmatmul.mubr.f32.gmra.mxu0 %v237
        %v420 = vpop.f32.mrf.mxu0
        %v421 = vadd.f32 0.0, %v420
        %v422 = vpop.f32.mrf.mxu0
        %423 = vmatprep.mubr.f32.mxu0 0.0
        %424 = vmatmul.mubr.f32.gmra.mxu0 %v240
        %v425 = vpop.f32.mrf.mxu0
        %v426 = vadd.f32 0.0, %v425
        %v427 = vpop.f32.mrf.mxu0
        %428 = vmatprep.mubr.f32.mxu0 0.0
        %429 = vmatmul.mubr.f32.gmra.mxu0 %v243
        %v430 = vpop.f32.mrf.mxu0
        %v431 = vadd.f32 0.0, %v430
        %v432 = vpop.f32.mrf.mxu0
        %433 = vmatprep.mubr.f32.mxu0 0.0
        %434 = vmatmul.mubr.f32.gmra.mxu0 %v246
        %v435 = vpop.f32.mrf.mxu0
        %v436 = vadd.f32 0.0, %v435
        %v437 = vpop.f32.mrf.mxu0
        %438 = vmatprep.mubr.f32.mxu0 0.0
        %439 = vmatmul.mubr.f32.gmra.mxu0 %v249
        %v440 = vpop.f32.mrf.mxu0
        %v441 = vadd.f32 0.0, %v440
        %v442 = vpop.f32.mrf.mxu0
        %443 = vmatprep.mubr.f32.mxu0 0.0
        %444 = vmatmul.mubr.f32.gmra.mxu0 %v252
        %v445 = vpop.f32.mrf.mxu0
        %v446 = vadd.f32 0.0, %v445
        %v447 = vpop.f32.mrf.mxu0
        %448 = vmatprep.mubr.f32.mxu0 0.0
        %449 = vmatmul.mubr.f32.gmra.mxu0 %v255
        %v450 = vpop.f32.mrf.mxu0
        %v451 = vadd.f32 0.0, %v450
        %v452 = vpop.f32.mrf.mxu0
        %453 = vmatprep.mubr.f32.mxu0 0.0
        %454 = vmatmul.mubr.f32.gmra.mxu0 %v258
        %v455 = vpop.f32.mrf.mxu0
        %v456 = vadd.f32 0.0, %v455
        %v457 = vpop.f32.mrf.mxu0
        %458 = vmatprep.mubr.f32.mxu0 0.0
        %459 = vmatmul.mubr.f32.gmra.mxu0 %v261
        %v460 = vpop.f32.mrf.mxu0
        %v461 = vadd.f32 0.0, %v460
        %v462 = vpop.f32.mrf.mxu0
        %463 = vmatprep.mubr.f32.mxu0 0.0
        %464 = vmatmul.mubr.f32.gmra.mxu0 %v264
        %v465 = vpop.f32.mrf.mxu0
        %v466 = vadd.f32 0.0, %v465
        %v467 = vpop.f32.mrf.mxu0
        %468 = vmatprep.mubr.f32.mxu0 0.0
        %469 = vmatmul.mubr.f32.gmra.mxu0 %v267
        %v470 = vpop.f32.mrf.mxu0
        %v471 = vadd.f32 0.0, %v470
        %v472 = vpop.f32.mrf.mxu0
        %473 = vmatprep.mubr.f32.mxu0 0.0
        %474 = vmatmul.mubr.f32.gmra.mxu0 %v270
        %v475 = vpop.f32.mrf.mxu0
        %v476 = vadd.f32 0.0, %v475
        %v477 = vpop.f32.mrf.mxu0
        %478 = vmatprep.mubr.f32.mxu0 0.0
        %479 = vmatmul.mubr.f32.gmra.mxu0 %v273
        %v480 = vpop.f32.mrf.mxu0
        %v481 = vadd.f32 0.0, %v480
        %v482 = vpop.f32.mrf.mxu0
        %483 = vmatprep.mubr.f32.mxu0 0.0
        %484 = vmatmul.mubr.f32.gmra.mxu0 %v276
        %v485 = vpop.f32.mrf.mxu0
        %v486 = vadd.f32 0.0, %v485
        %v487 = vpop.f32.mrf.mxu0
        %488 = vmatprep.mubr.f32.mxu0 0.0
        %489 = vmatmul.mubr.f32.gmra.mxu0 %v279
        %v490 = vpop.f32.mrf.mxu0
        %v491 = vadd.f32 0.0, %v490
        %v492 = vpop.f32.mrf.mxu0
        %493 = vmatprep.mubr.f32.mxu0 0.0
        %494 = vmatmul.mubr.f32.gmra.mxu0 %v282
        %v495 = vpop.f32.mrf.mxu0
        %v496 = vadd.f32 0.0, %v495
        %v497 = vpop.f32.mrf.mxu0
        %498 = vmatprep.mubr.f32.mxu0 0.0
        %499 = vmatmul.mubr.f32.gmra.mxu0 %v285
        %v500 = vpop.f32.mrf.mxu0
        %v501 = vadd.f32 0.0, %v500
        %v502 = vpop.f32.mrf.mxu0
        %503 = vmatprep.mubr.f32.mxu0 0.0
        %504 = vmatmul.mubr.f32.gmra.mxu0 %v288
        %v505 = vpop.f32.mrf.mxu0
        %v506 = vadd.f32 0.0, %v505
        %v507 = vpop.f32.mrf.mxu0
        %508 = vmatprep.mubr.f32.mxu0 0.0
        %509 = vmatmul.mubr.f32.gmra.mxu0 %v291
        %v510 = vpop.f32.mrf.mxu0
        %v511 = vadd.f32 0.0, %v510
        %v512 = vpop.f32.mrf.mxu0
        %513 = vmatprep.mubr.f32.mxu0 0.0
        %514 = vmatmul.mubr.f32.gmra.mxu0 %v294
        %v515 = vpop.f32.mrf.mxu0
        %v516 = vadd.f32 0.0, %v515
        %v517 = vpop.f32.mrf.mxu0
        %518 = vmatprep.mubr.f32.mxu0 0.0
        %519 = vmatmul.mubr.f32.gmra.mxu0 %v297
        %v520 = vpop.f32.mrf.mxu0
        %v521 = vadd.f32 0.0, %v520
        %v522 = vpop.f32.mrf.mxu0
        %523 = vdwg.mxu0
        %v524 = vld [vmem:[%s1 + $0x100] sm:$0xff]
        %v525 = vld [vmem:[%s1 + $0x108] sm:$0xff]
        %v526 = vld [vmem:[%s1 + $0x110] sm:$0xff]
        %v527 = vld [vmem:[%s1 + $0x118] sm:$0xff]
        %v528 = vld [vmem:[%s1 + $0x120] sm:$0xff]
        %v529 = vld [vmem:[%s1 + $0x128] sm:$0xff]
        %v530 = vld [vmem:[%s1 + $0x130] sm:$0xff]
        %v531 = vld [vmem:[%s1 + $0x138] sm:$0xff]
        %v532 = vld [vmem:[%s1 + $0x140] sm:$0xff]
        %v533 = vld [vmem:[%s1 + $0x148] sm:$0xff]
        %v534 = vld [vmem:[%s1 + $0x150] sm:$0xff]
        %v535 = vld [vmem:[%s1 + $0x158] sm:$0xff]
        %v536 = vld [vmem:[%s1 + $0x160] sm:$0xff]
        %v537 = vld [vmem:[%s1 + $0x168] sm:$0xff]
        %v538 = vld [vmem:[%s1 + $0x170] sm:$0xff]
        %v539 = vld [vmem:[%s1 + $0x178] sm:$0xff]
        %vm540 = vcmask 64512
        %v541 = vsel %vm540, %v366, 0.0
        %542 = vadd.xlane.f32.xlu0 %v541
        %v543 = vpop.xlane.xlu0 %542
        %v544 = vsel %vm540, %v371, 0.0
        %545 = vadd.xlane.f32.xlu0 %v544
        %v546 = vpop.xlane.xlu0 %545
        %v547 = vsel %vm540, %v376, 0.0
        %548 = vadd.xlane.f32.xlu0 %v547
        %v549 = vpop.xlane.xlu0 %548
        %v550 = vsel %vm540, %v381, 0.0
        %551 = vadd.xlane.f32.xlu0 %v550
        %v552 = vpop.xlane.xlu0 %551
        %v553 = vsel %vm540, %v386, 0.0
        %554 = vadd.xlane.f32.xlu0 %v553
        %v555 = vpop.xlane.xlu0 %554
        %v556 = vsel %vm540, %v391, 0.0
        %557 = vadd.xlane.f32.xlu0 %v556
        %v558 = vpop.xlane.xlu0 %557
        %v559 = vsel %vm540, %v396, 0.0
        %560 = vadd.xlane.f32.xlu0 %v559
        %v561 = vpop.xlane.xlu0 %560
        %v562 = vsel %vm540, %v401, 0.0
        %563 = vadd.xlane.f32.xlu0 %v562
        %v564 = vpop.xlane.xlu0 %563
        %v565 = vsel %vm540, %v406, 0.0
        %566 = vadd.xlane.f32.xlu0 %v565
        %v567 = vpop.xlane.xlu0 %566
        %v568 = vsel %vm540, %v411, 0.0
        %569 = vadd.xlane.f32.xlu0 %v568
        %v570 = vpop.xlane.xlu0 %569
        %v571 = vsel %vm540, %v416, 0.0
        %572 = vadd.xlane.f32.xlu0 %v571
        %v573 = vpop.xlane.xlu0 %572
        %v574 = vsel %vm540, %v421, 0.0
        %575 = vadd.xlane.f32.xlu0 %v574
        %v576 = vpop.xlane.xlu0 %575
        %v577 = vsel %vm540, %v426, 0.0
        %578 = vadd.xlane.f32.xlu0 %v577
        %v579 = vpop.xlane.xlu0 %578
        %v580 = vsel %vm540, %v431, 0.0
        %581 = vadd.xlane.f32.xlu0 %v580
        %v582 = vpop.xlane.xlu0 %581
        %v583 = vsel %vm540, %v436, 0.0
        %584 = vadd.xlane.f32.xlu0 %v583
        %v585 = vpop.xlane.xlu0 %584
        %v586 = vsel %vm540, %v441, 0.0
        %587 = vadd.xlane.f32.xlu0 %v586
        %v588 = vpop.xlane.xlu0 %587
        %v589 = vrcp.pop 8.0
        %v590 = vmul.f32 %v543, %v589
        %v591 = vmul.f32 %v546, %v589
        %v592 = vmul.f32 %v549, %v589
        %v593 = vmul.f32 %v552, %v589
        %v594 = vmul.f32 %v555, %v589
        %v595 = vmul.f32 %v558, %v589
        %v596 = vmul.f32 %v561, %v589
        %v597 = vmul.f32 %v564, %v589
        %v598 = vmul.f32 %v567, %v589
        %v599 = vmul.f32 %v570, %v589
        %v600 = vmul.f32 %v573, %v589
        %v601 = vmul.f32 %v576, %v589
        %v602 = vmul.f32 %v579, %v589
        %v603 = vmul.f32 %v582, %v589
        %v604 = vmul.f32 %v585, %v589
        %v605 = vmul.f32 %v588, %v589
        %v606 = vmul.f32 %v366, %v366
        %v607 = vmul.f32 %v371, %v371
        %v608 = vmul.f32 %v376, %v376
        %v609 = vmul.f32 %v381, %v381
        %v610 = vmul.f32 %v386, %v386
        %v611 = vmul.f32 %v391, %v391
        %v612 = vmul.f32 %v396, %v396
        %v613 = vmul.f32 %v401, %v401
        %v614 = vmul.f32 %v406, %v406
        %v615 = vmul.f32 %v411, %v411
        %v616 = vmul.f32 %v416, %v416
        %v617 = vmul.f32 %v421, %v421
        %v618 = vmul.f32 %v426, %v426
        %v619 = vmul.f32 %v431, %v431
        %v620 = vmul.f32 %v436, %v436
        %v621 = vmul.f32 %v441, %v441
        %v622 = vsel %vm540, %v606, 0.0
        %623 = vadd.xlane.f32.xlu0 %v622
        %v624 = vpop.xlane.xlu0 %623
        %v625 = vsel %vm540, %v607, 0.0
        %626 = vadd.xlane.f32.xlu0 %v625
        %v627 = vpop.xlane.xlu0 %626
        %v628 = vsel %vm540, %v608, 0.0
        %629 = vadd.xlane.f32.xlu0 %v628
        %v630 = vpop.xlane.xlu0 %629
        %v631 = vsel %vm540, %v609, 0.0
        %632 = vadd.xlane.f32.xlu0 %v631
        %v633 = vpop.xlane.xlu0 %632
        %v634 = vsel %vm540, %v610, 0.0
        %635 = vadd.xlane.f32.xlu0 %v634
        %v636 = vpop.xlane.xlu0 %635
        %v637 = vsel %vm540, %v611, 0.0
        %638 = vadd.xlane.f32.xlu0 %v637
        %v639 = vpop.xlane.xlu0 %638
        %v640 = vsel %vm540, %v612, 0.0
        %641 = vadd.xlane.f32.xlu0 %v640
        %v642 = vpop.xlane.xlu0 %641
        %v643 = vsel %vm540, %v613, 0.0
        %644 = vadd.xlane.f32.xlu0 %v643
        %v645 = vpop.xlane.xlu0 %644
        %v646 = vsel %vm540, %v614, 0.0
        %647 = vadd.xlane.f32.xlu0 %v646
        %v648 = vpop.xlane.xlu0 %647
        %v649 = vsel %vm540, %v615, 0.0
        %650 = vadd.xlane.f32.xlu0 %v649
        %v651 = vpop.xlane.xlu0 %650
        %v652 = vsel %vm540, %v616, 0.0
        %653 = vadd.xlane.f32.xlu0 %v652
        %v654 = vpop.xlane.xlu0 %653
        %v655 = vsel %vm540, %v617, 0.0
        %656 = vadd.xlane.f32.xlu0 %v655
        %v657 = vpop.xlane.xlu0 %656
        %v658 = vsel %vm540, %v618, 0.0
        %659 = vadd.xlane.f32.xlu0 %v658
        %v660 = vpop.xlane.xlu0 %659
        %v661 = vsel %vm540, %v619, 0.0
        %662 = vadd.xlane.f32.xlu0 %v661
        %v663 = vpop.xlane.xlu0 %662
        %v664 = vsel %vm540, %v620, 0.0
        %665 = vadd.xlane.f32.xlu0 %v664
        %v666 = vpop.xlane.xlu0 %665
        %v667 = vsel %vm540, %v621, 0.0
        %668 = vadd.xlane.f32.xlu0 %v667
        %v669 = vpop.xlane.xlu0 %668
        %v670 = vmul.f32 %v624, %v589
        %v671 = vmul.f32 %v627, %v589
        %v672 = vmul.f32 %v630, %v589
        %v673 = vmul.f32 %v633, %v589
        %v674 = vmul.f32 %v636, %v589
        %v675 = vmul.f32 %v639, %v589
        %v676 = vmul.f32 %v642, %v589
        %v677 = vmul.f32 %v645, %v589
        %v678 = vmul.f32 %v648, %v589
        %v679 = vmul.f32 %v651, %v589
        %v680 = vmul.f32 %v654, %v589
        %v681 = vmul.f32 %v657, %v589
        %v682 = vmul.f32 %v660, %v589
        %v683 = vmul.f32 %v663, %v589
        %v684 = vmul.f32 %v666, %v589
        %v685 = vmul.f32 %v669, %v589
        %v686 = vmul.f32 %v590, %v590
        %v687 = vmul.f32 %v591, %v591
        %v688 = vmul.f32 %v592, %v592
        %v689 = vmul.f32 %v593, %v593
        %v690 = vmul.f32 %v594, %v594
        %v691 = vmul.f32 %v595, %v595
        %v692 = vmul.f32 %v596, %v596
        %v693 = vmul.f32 %v597, %v597
        %v694 = vmul.f32 %v598, %v598
        %v695 = vmul.f32 %v599, %v599
        %v696 = vmul.f32 %v600, %v600
        %v697 = vmul.f32 %v601, %v601
        %v698 = vmul.f32 %v602, %v602
        %v699 = vmul.f32 %v603, %v603
        %v700 = vmul.f32 %v604, %v604
        %v701 = vmul.f32 %v605, %v605
        %v702 = vsub.f32 %v670, %v686
        %v703 = vsub.f32 %v671, %v687
        %v704 = vsub.f32 %v672, %v688
        %v705 = vsub.f32 %v673, %v689
        %v706 = vsub.f32 %v674, %v690
        %v707 = vsub.f32 %v675, %v691
        %v708 = vsub.f32 %v676, %v692
        %v709 = vsub.f32 %v677, %v693
        %v710 = vsub.f32 %v678, %v694
        %v711 = vsub.f32 %v679, %v695
        %v712 = vsub.f32 %v680, %v696
        %v713 = vsub.f32 %v681, %v697
        %v714 = vsub.f32 %v682, %v698
        %v715 = vsub.f32 %v683, %v699
        %v716 = vsub.f32 %v684, %v700
        %v717 = vsub.f32 %v685, %v701
        %v718 = vmax.f32 %v702, 0.0
        %v719 = vmax.f32 %v703, 0.0
        %v720 = vmax.f32 %v704, 0.0
        %v721 = vmax.f32 %v705, 0.0
        %v722 = vmax.f32 %v706, 0.0
        %v723 = vmax.f32 %v707, 0.0
        %v724 = vmax.f32 %v708, 0.0
        %v725 = vmax.f32 %v709, 0.0
        %v726 = vmax.f32 %v710, 0.0
        %v727 = vmax.f32 %v711, 0.0
        %v728 = vmax.f32 %v712, 0.0
        %v729 = vmax.f32 %v713, 0.0
        %v730 = vmax.f32 %v714, 0.0
        %v731 = vmax.f32 %v715, 0.0
        %v732 = vmax.f32 %v716, 0.0
        %v733 = vmax.f32 %v717, 0.0
        %v734 = vadd.f32 %v718, 1e-05
        %v735 = vadd.f32 %v719, 1e-05
        %v736 = vadd.f32 %v720, 1e-05
        %v737 = vadd.f32 %v721, 1e-05
        %v738 = vadd.f32 %v722, 1e-05
        %v739 = vadd.f32 %v723, 1e-05
        %v740 = vadd.f32 %v724, 1e-05
        %v741 = vadd.f32 %v725, 1e-05
        %v742 = vadd.f32 %v726, 1e-05
        %v743 = vadd.f32 %v727, 1e-05
        %v744 = vadd.f32 %v728, 1e-05
        %v745 = vadd.f32 %v729, 1e-05
        %v746 = vadd.f32 %v730, 1e-05
        %v747 = vadd.f32 %v731, 1e-05
        %v748 = vadd.f32 %v732, 1e-05
        %v749 = vadd.f32 %v733, 1e-05
        %v750 = vrsqrt.pop %v734
        %v751 = vrsqrt.pop %v735
        %v752 = vrsqrt.pop %v736
        %v753 = vrsqrt.pop %v737
        %v754 = vrsqrt.pop %v738
        %v755 = vrsqrt.pop %v739
        %v756 = vrsqrt.pop %v740
        %v757 = vrsqrt.pop %v741
        %v758 = vrsqrt.pop %v742
        %v759 = vrsqrt.pop %v743
        %v760 = vrsqrt.pop %v744
        %v761 = vrsqrt.pop %v745
        %v762 = vrsqrt.pop %v746
        %v763 = vrsqrt.pop %v747
        %v764 = vrsqrt.pop %v748
        %v765 = vrsqrt.pop %v749
        %v766 = vmul.f32 %v524, %v750
        %v767 = vmul.f32 %v525, %v751
        %v768 = vmul.f32 %v526, %v752
        %v769 = vmul.f32 %v527, %v753
        %v770 = vmul.f32 %v528, %v754
        %v771 = vmul.f32 %v529, %v755
        %v772 = vmul.f32 %v530, %v756
        %v773 = vmul.f32 %v531, %v757
        %v774 = vmul.f32 %v532, %v758
        %v775 = vmul.f32 %v533, %v759
        %v776 = vmul.f32 %v534, %v760
        %v777 = vmul.f32 %v535, %v761
        %v778 = vmul.f32 %v536, %v762
        %v779 = vmul.f32 %v537, %v763
        %v780 = vmul.f32 %v538, %v764
        %v781 = vmul.f32 %v539, %v765
        %783 = vset.pattern.permute.xlu0 0
        %784 = vperm.xlu0 %783, %v766
        %v785 = vpop.permute.xlu0 %784
        %788 = vset.pattern.permute.xlu0 0
        %789 = vperm.xlu0 %788, %v767
        %v790 = vpop.permute.xlu0 %789
        %793 = vset.pattern.permute.xlu0 0
        %794 = vperm.xlu0 %793, %v768
        %v795 = vpop.permute.xlu0 %794
        %798 = vset.pattern.permute.xlu0 0
        %799 = vperm.xlu0 %798, %v769
        %v800 = vpop.permute.xlu0 %799
        %803 = vset.pattern.permute.xlu0 0
        %804 = vperm.xlu0 %803, %v770
        %v805 = vpop.permute.xlu0 %804
        %808 = vset.pattern.permute.xlu0 0
        %809 = vperm.xlu0 %808, %v771
        %v810 = vpop.permute.xlu0 %809
        %813 = vset.pattern.permute.xlu0 0
        %814 = vperm.xlu0 %813, %v772
        %v815 = vpop.permute.xlu0 %814
        %818 = vset.pattern.permute.xlu0 0
        %819 = vperm.xlu0 %818, %v773
        %v820 = vpop.permute.xlu0 %819
        %823 = vset.pattern.permute.xlu0 0
        %824 = vperm.xlu0 %823, %v774
        %v825 = vpop.permute.xlu0 %824
        %828 = vset.pattern.permute.xlu0 0
        %829 = vperm.xlu0 %828, %v775
        %v830 = vpop.permute.xlu0 %829
        %833 = vset.pattern.permute.xlu0 0
        %834 = vperm.xlu0 %833, %v776
        %v835 = vpop.permute.xlu0 %834
        %838 = vset.pattern.permute.xlu0 0
        %839 = vperm.xlu0 %838, %v777
        %v840 = vpop.permute.xlu0 %839
        %843 = vset.pattern.permute.xlu0 0
        %844 = vperm.xlu0 %843, %v778
        %v845 = vpop.permute.xlu0 %844
        %848 = vset.pattern.permute.xlu0 0
        %849 = vperm.xlu0 %848, %v779
        %v850 = vpop.permute.xlu0 %849
        %853 = vset.pattern.permute.xlu0 0
        %854 = vperm.xlu0 %853, %v780
        %v855 = vpop.permute.xlu0 %854
        %858 = vset.pattern.permute.xlu0 0
        %859 = vperm.xlu0 %858, %v781
        %v860 = vpop.permute.xlu0 %859
        %v862 = vmul.f32 %v366, %v785
        %v863 = vmul.f32 %v371, %v790
        %v864 = vmul.f32 %v376, %v795
        %v865 = vmul.f32 %v381, %v800
        %v866 = vmul.f32 %v386, %v805
        %v867 = vmul.f32 %v391, %v810
        %v868 = vmul.f32 %v396, %v815
        %v869 = vmul.f32 %v401, %v820
        %v870 = vmul.f32 %v406, %v825
        %v871 = vmul.f32 %v411, %v830
        %v872 = vmul.f32 %v416, %v835
        %v873 = vmul.f32 %v421, %v840
        %v874 = vmul.f32 %v426, %v845
        %v875 = vmul.f32 %v431, %v850
        %v876 = vmul.f32 %v436, %v855
        %v877 = vmul.f32 %v441, %v860
        %v878 = vmul.f32 %v590, %v766
        %v879 = vmul.f32 %v591, %v767
        %v880 = vmul.f32 %v592, %v768
        %v881 = vmul.f32 %v593, %v769
        %v882 = vmul.f32 %v594, %v770
        %v883 = vmul.f32 %v595, %v771
        %v884 = vmul.f32 %v596, %v772
        %v885 = vmul.f32 %v597, %v773
        %v886 = vmul.f32 %v598, %v774
        %v887 = vmul.f32 %v599, %v775
        %v888 = vmul.f32 %v600, %v776
        %v889 = vmul.f32 %v601, %v777
        %v890 = vmul.f32 %v602, %v778
        %v891 = vmul.f32 %v603, %v779
        %v892 = vmul.f32 %v604, %v780
        %v893 = vmul.f32 %v605, %v781
        %910 = vrot.lane.b32.xlu0 %v878, 1
        %v911 = vpop.permute.xlu0 %910
        %912 = vrot.lane.b32.xlu0 %v879, 1
        %v913 = vpop.permute.xlu0 %912
        %914 = vrot.lane.b32.xlu0 %v880, 1
        %v915 = vpop.permute.xlu0 %914
        %916 = vrot.lane.b32.xlu0 %v881, 1
        %v917 = vpop.permute.xlu0 %916
        %918 = vrot.lane.b32.xlu0 %v882, 1
        %v919 = vpop.permute.xlu0 %918
        %920 = vrot.lane.b32.xlu0 %v883, 1
        %v921 = vpop.permute.xlu0 %920
        %922 = vrot.lane.b32.xlu0 %v884, 1
        %v923 = vpop.permute.xlu0 %922
        %924 = vrot.lane.b32.xlu0 %v885, 1
        %v925 = vpop.permute.xlu0 %924
        %926 = vrot.lane.b32.xlu0 %v886, 1
        %v927 = vpop.permute.xlu0 %926
        %928 = vrot.lane.b32.xlu0 %v887, 1
        %v929 = vpop.permute.xlu0 %928
        %930 = vrot.lane.b32.xlu0 %v888, 1
        %v931 = vpop.permute.xlu0 %930
        %932 = vrot.lane.b32.xlu0 %v889, 1
        %v933 = vpop.permute.xlu0 %932
        %934 = vrot.lane.b32.xlu0 %v890, 1
        %v935 = vpop.permute.xlu0 %934
        %936 = vrot.lane.b32.xlu0 %v891, 1
        %v937 = vpop.permute.xlu0 %936
        %938 = vrot.lane.b32.xlu0 %v892, 1
        %v939 = vpop.permute.xlu0 %938
        %940 = vrot.lane.b32.xlu0 %v893, 1
        %v941 = vpop.permute.xlu0 %940
        %v958 = vsub.f32 %v524, %v911
        %v959 = vsub.f32 %v525, %v913
        %v960 = vsub.f32 %v526, %v915
        %v961 = vsub.f32 %v527, %v917
        %v962 = vsub.f32 %v528, %v919
        %v963 = vsub.f32 %v529, %v921
        %v964 = vsub.f32 %v530, %v923
        %v965 = vsub.f32 %v531, %v925
        %v966 = vsub.f32 %v532, %v927
        %v967 = vsub.f32 %v533, %v929
        %v968 = vsub.f32 %v534, %v931
        %v969 = vsub.f32 %v535, %v933
        %v970 = vsub.f32 %v536, %v935
        %v971 = vsub.f32 %v537, %v937
        %v972 = vsub.f32 %v538, %v939
        %v973 = vsub.f32 %v539, %v941
        %975 = vset.pattern.permute.xlu0 1
        %976 = vperm.xlu0 %975, %v958
        %v977 = vpop.permute.xlu0 %976
        %980 = vset.pattern.permute.xlu0 1
        %981 = vperm.xlu0 %980, %v959
        %v982 = vpop.permute.xlu0 %981
        %985 = vset.pattern.permute.xlu0 1
        %986 = vperm.xlu0 %985, %v960
        %v987 = vpop.permute.xlu0 %986
        %990 = vset.pattern.permute.xlu0 1
        %991 = vperm.xlu0 %990, %v961
        %v992 = vpop.permute.xlu0 %991
        %995 = vset.pattern.permute.xlu0 1
        %996 = vperm.xlu0 %995, %v962
        %v997 = vpop.permute.xlu0 %996
        %1000 = vset.pattern.permute.xlu0 1
        %1001 = vperm.xlu0 %1000, %v963
        %v1002 = vpop.permute.xlu0 %1001
        %1005 = vset.pattern.permute.xlu0 1
        %1006 = vperm.xlu0 %1005, %v964
        %v1007 = vpop.permute.xlu0 %1006
        %1010 = vset.pattern.permute.xlu0 1
        %1011 = vperm.xlu0 %1010, %v965
        %v1012 = vpop.permute.xlu0 %1011
        %1015 = vset.pattern.permute.xlu0 1
        %1016 = vperm.xlu0 %1015, %v966
        %v1017 = vpop.permute.xlu0 %1016
        %1020 = vset.pattern.permute.xlu0 1
        %1021 = vperm.xlu0 %1020, %v967
        %v1022 = vpop.permute.xlu0 %1021
        %1025 = vset.pattern.permute.xlu0 1
        %1026 = vperm.xlu0 %1025, %v968
        %v1027 = vpop.permute.xlu0 %1026
        %1030 = vset.pattern.permute.xlu0 1
        %1031 = vperm.xlu0 %1030, %v969
        %v1032 = vpop.permute.xlu0 %1031
        %1035 = vset.pattern.permute.xlu0 1
        %1036 = vperm.xlu0 %1035, %v970
        %v1037 = vpop.permute.xlu0 %1036
        %1040 = vset.pattern.permute.xlu0 1
        %1041 = vperm.xlu0 %1040, %v971
        %v1042 = vpop.permute.xlu0 %1041
        %1045 = vset.pattern.permute.xlu0 1
        %1046 = vperm.xlu0 %1045, %v972
        %v1047 = vpop.permute.xlu0 %1046
        %1050 = vset.pattern.permute.xlu0 1
        %1051 = vperm.xlu0 %1050, %v973
        %v1052 = vpop.permute.xlu0 %1051
        %v1054 = vadd.f32 %v862, %v977
        %v1055 = vadd.f32 %v863, %v982
        %v1056 = vadd.f32 %v864, %v987
        %v1057 = vadd.f32 %v865, %v992
        %v1058 = vadd.f32 %v866, %v997
        %v1059 = vadd.f32 %v867, %v1002
        %v1060 = vadd.f32 %v868, %v1007
        %v1061 = vadd.f32 %v869, %v1012
        %v1062 = vadd.f32 %v870, %v1017
        %v1063 = vadd.f32 %v871, %v1022
        %v1064 = vadd.f32 %v872, %v1027
        %v1065 = vadd.f32 %v873, %v1032
        %v1066 = vadd.f32 %v874, %v1037
        %v1067 = vadd.f32 %v875, %v1042
        %v1068 = vadd.f32 %v876, %v1047
        %v1069 = vadd.f32 %v877, %v1052
        %v1070 = vmax.f32 %v1054, 0.0
        %v1071 = vmax.f32 %v1055, 0.0
        %v1072 = vmax.f32 %v1056, 0.0
        %v1073 = vmax.f32 %v1057, 0.0
        %v1074 = vmax.f32 %v1058, 0.0
        %v1075 = vmax.f32 %v1059, 0.0
        %v1076 = vmax.f32 %v1060, 0.0
        %v1077 = vmax.f32 %v1061, 0.0
        %v1078 = vmax.f32 %v1062, 0.0
        %v1079 = vmax.f32 %v1063, 0.0
        %v1080 = vmax.f32 %v1064, 0.0
        %v1081 = vmax.f32 %v1065, 0.0
        %v1082 = vmax.f32 %v1066, 0.0
        %v1083 = vmax.f32 %v1067, 0.0
        %v1084 = vmax.f32 %v1068, 0.0
        %v1085 = vmax.f32 %v1069, 0.0
        %v1086 = vld [vmem:[%s2] sm:$0xff]
        %v1087 = vld [vmem:[%s2 + $0x8] sm:$0xff]
        %v1088 = vld [vmem:[%s2 + $0x10] sm:$0xff]
        %v1089 = vld [vmem:[%s2 + $0x18] sm:$0xff]
        %v1090 = vld [vmem:[%s2 + $0x20] sm:$0xff]
        %v1091 = vld [vmem:[%s2 + $0x28] sm:$0xff]
        %v1092 = vld [vmem:[%s2 + $0x30] sm:$0xff]
        %v1093 = vld [vmem:[%s2 + $0x38] sm:$0xff]
        %v1094 = vld [vmem:[%s2 + $0x40] sm:$0xff]
        %v1095 = vld [vmem:[%s2 + $0x48] sm:$0xff]
        %v1096 = vld [vmem:[%s2 + $0x50] sm:$0xff]
        %v1097 = vld [vmem:[%s2 + $0x58] sm:$0xff]
        %v1098 = vld [vmem:[%s2 + $0x60] sm:$0xff]
        %v1099 = vld [vmem:[%s2 + $0x68] sm:$0xff]
        %v1100 = vld [vmem:[%s2 + $0x70] sm:$0xff]
        %v1101 = vld [vmem:[%s2 + $0x78] sm:$0xff]
        %1102 = vmatprep.subr.mxu0 0.0
        %1103 = vmatpush1.msra.mxu0 %v1085
        %1104 = vmatprep.subr.mxu0 0.0
        %1105 = vmatpush1.msra.mxu0 %v1084
        %1106 = vmatprep.subr.mxu0 0.0
        %1107 = vmatpush1.msra.mxu0 %v1083
        %1108 = vmatprep.subr.mxu0 0.0
        %1109 = vmatpush1.msra.mxu0 %v1082
        %1110 = vmatprep.subr.mxu0 0.0
        %1111 = vmatpush1.msra.mxu0 %v1081
        %1112 = vmatprep.subr.mxu0 0.0
        %1113 = vmatpush1.msra.mxu0 %v1080
        %1114 = vmatprep.subr.mxu0 0.0
        %1115 = vmatpush1.msra.mxu0 %v1079
        %1116 = vmatprep.subr.mxu0 0.0
        %1117 = vmatpush1.msra.mxu0 %v1078
        %1118 = vmatprep.subr.mxu0 0.0
        %1119 = vmatpush1.msra.mxu0 %v1077
        %1120 = vmatprep.subr.mxu0 0.0
        %1121 = vmatpush1.msra.mxu0 %v1076
        %1122 = vmatprep.subr.mxu0 0.0
        %1123 = vmatpush1.msra.mxu0 %v1075
        %1124 = vmatprep.subr.mxu0 0.0
        %1125 = vmatpush1.msra.mxu0 %v1074
        %1126 = vmatprep.subr.mxu0 0.0
        %1127 = vmatpush1.msra.mxu0 %v1073
        %1128 = vmatprep.subr.mxu0 0.0
        %1129 = vmatpush1.msra.mxu0 %v1072
        %1130 = vmatprep.subr.mxu0 0.0
        %1131 = vmatpush1.msra.mxu0 %v1071
        %1132 = vmatprep.subr.mxu0 0.0
        %1133 = vmatpush1.msra.mxu0 %v1070
        %1134 = vmatprep.subr.mxu0 0.0
        %1135 = vmatpush2.msra.mxu0 0.0
        %1136 = vmatprep.subr.mxu0 0.0
        %1137 = vmatpush2.msra.mxu0 0.0
        %1138 = vmatprep.subr.mxu0 0.0
        %1139 = vmatpush2.msra.mxu0 0.0
        %1140 = vmatprep.subr.mxu0 0.0
        %1141 = vmatpush2.msra.mxu0 0.0
        %1142 = vmatprep.subr.mxu0 0.0
        %1143 = vmatpush2.msra.mxu0 0.0
        %1144 = vmatprep.subr.mxu0 0.0
        %1145 = vmatpush2.msra.mxu0 0.0
        %1146 = vmatprep.subr.mxu0 0.0
        %1147 = vmatpush2.msra.mxu0 0.0
        %1148 = vmatprep.subr.mxu0 0.0
        %1149 = vmatpush2.msra.mxu0 0.0
        %1150 = vmatprep.subr.mxu0 0.0
        %1151 = vmatpush2.msra.mxu0 0.0
        %1152 = vmatprep.subr.mxu0 0.0
        %1153 = vmatpush2.msra.mxu0 0.0
        %1154 = vmatprep.subr.mxu0 0.0
        %1155 = vmatpush2.msra.mxu0 0.0
        %1156 = vmatprep.subr.mxu0 0.0
        %1157 = vmatpush2.msra.mxu0 0.0
        %1158 = vmatprep.subr.mxu0 0.0
        %1159 = vmatpush2.msra.mxu0 0.0
        %1160 = vmatprep.subr.mxu0 0.0
        %1161 = vmatpush2.msra.mxu0 0.0
        %1162 = vmatprep.subr.mxu0 0.0
        %1163 = vmatpush2.msra.mxu0 0.0
        %1164 = vmatprep.subr.mxu0 0.0
        %1165 = vmatpush2.msra.mxu0 0.0
        %1166 = vmatprep.mubr.f32.mxu0 0.0
        %1167 = vmatmul.mubr.f32.gmra.mxu0 %v1086
        %v1168 = vpop.f32.mrf.mxu0
        %v1169 = vadd.f32 %v446, %v1168
        %v1170 = vpop.f32.mrf.mxu0
        %1171 = vmatprep.mubr.f32.mxu0 0.0
        %1172 = vmatmul.mubr.f32.gmra.mxu0 %v1087
        %v1173 = vpop.f32.mrf.mxu0
        %v1174 = vadd.f32 %v451, %v1173
        %v1175 = vpop.f32.mrf.mxu0
        %1176 = vmatprep.mubr.f32.mxu0 0.0
        %1177 = vmatmul.mubr.f32.gmra.mxu0 %v1088
        %v1178 = vpop.f32.mrf.mxu0
        %v1179 = vadd.f32 %v456, %v1178
        %v1180 = vpop.f32.mrf.mxu0
        %1181 = vmatprep.mubr.f32.mxu0 0.0
        %1182 = vmatmul.mubr.f32.gmra.mxu0 %v1089
        %v1183 = vpop.f32.mrf.mxu0
        %v1184 = vadd.f32 %v461, %v1183
        %v1185 = vpop.f32.mrf.mxu0
        %1186 = vmatprep.mubr.f32.mxu0 0.0
        %1187 = vmatmul.mubr.f32.gmra.mxu0 %v1090
        %v1188 = vpop.f32.mrf.mxu0
        %v1189 = vadd.f32 %v466, %v1188
        %v1190 = vpop.f32.mrf.mxu0
        %1191 = vmatprep.mubr.f32.mxu0 0.0
        %1192 = vmatmul.mubr.f32.gmra.mxu0 %v1091
        %v1193 = vpop.f32.mrf.mxu0
        %v1194 = vadd.f32 %v471, %v1193
        %v1195 = vpop.f32.mrf.mxu0
        %1196 = vmatprep.mubr.f32.mxu0 0.0
        %1197 = vmatmul.mubr.f32.gmra.mxu0 %v1092
        %v1198 = vpop.f32.mrf.mxu0
        %v1199 = vadd.f32 %v476, %v1198
        %v1200 = vpop.f32.mrf.mxu0
        %1201 = vmatprep.mubr.f32.mxu0 0.0
        %1202 = vmatmul.mubr.f32.gmra.mxu0 %v1093
        %v1203 = vpop.f32.mrf.mxu0
        %v1204 = vadd.f32 %v481, %v1203
        %v1205 = vpop.f32.mrf.mxu0
        %1206 = vmatprep.mubr.f32.mxu0 0.0
        %1207 = vmatmul.mubr.f32.gmra.mxu0 %v1094
        %v1208 = vpop.f32.mrf.mxu0
        %v1209 = vadd.f32 %v486, %v1208
        %v1210 = vpop.f32.mrf.mxu0
        %1211 = vmatprep.mubr.f32.mxu0 0.0
        %1212 = vmatmul.mubr.f32.gmra.mxu0 %v1095
        %v1213 = vpop.f32.mrf.mxu0
        %v1214 = vadd.f32 %v491, %v1213
        %v1215 = vpop.f32.mrf.mxu0
        %1216 = vmatprep.mubr.f32.mxu0 0.0
        %1217 = vmatmul.mubr.f32.gmra.mxu0 %v1096
        %v1218 = vpop.f32.mrf.mxu0
        %v1219 = vadd.f32 %v496, %v1218
        %v1220 = vpop.f32.mrf.mxu0
        %1221 = vmatprep.mubr.f32.mxu0 0.0
        %1222 = vmatmul.mubr.f32.gmra.mxu0 %v1097
        %v1223 = vpop.f32.mrf.mxu0
        %v1224 = vadd.f32 %v501, %v1223
        %v1225 = vpop.f32.mrf.mxu0
        %1226 = vmatprep.mubr.f32.mxu0 0.0
        %1227 = vmatmul.mubr.f32.gmra.mxu0 %v1098
        %v1228 = vpop.f32.mrf.mxu0
        %v1229 = vadd.f32 %v506, %v1228
        %v1230 = vpop.f32.mrf.mxu0
        %1231 = vmatprep.mubr.f32.mxu0 0.0
        %1232 = vmatmul.mubr.f32.gmra.mxu0 %v1099
        %v1233 = vpop.f32.mrf.mxu0
        %v1234 = vadd.f32 %v511, %v1233
        %v1235 = vpop.f32.mrf.mxu0
        %1236 = vmatprep.mubr.f32.mxu0 0.0
        %1237 = vmatmul.mubr.f32.gmra.mxu0 %v1100
        %v1238 = vpop.f32.mrf.mxu0
        %v1239 = vadd.f32 %v516, %v1238
        %v1240 = vpop.f32.mrf.mxu0
        %1241 = vmatprep.mubr.f32.mxu0 0.0
        %1242 = vmatmul.mubr.f32.gmra.mxu0 %v1101
        %v1243 = vpop.f32.mrf.mxu0
        %v1244 = vadd.f32 %v521, %v1243
        %v1245 = vpop.f32.mrf.mxu0
        %1246 = vdwg.mxu0
        %v1247 = vsel %vm540, %v1169, 0.0
        %1248 = vadd.xlane.f32.xlu0 %v1247
        %v1249 = vpop.xlane.xlu0 %1248
        %v1250 = vsel %vm540, %v1174, 0.0
        %1251 = vadd.xlane.f32.xlu0 %v1250
        %v1252 = vpop.xlane.xlu0 %1251
        %v1253 = vsel %vm540, %v1179, 0.0
        %1254 = vadd.xlane.f32.xlu0 %v1253
        %v1255 = vpop.xlane.xlu0 %1254
        %v1256 = vsel %vm540, %v1184, 0.0
        %1257 = vadd.xlane.f32.xlu0 %v1256
        %v1258 = vpop.xlane.xlu0 %1257
        %v1259 = vsel %vm540, %v1189, 0.0
        %1260 = vadd.xlane.f32.xlu0 %v1259
        %v1261 = vpop.xlane.xlu0 %1260
        %v1262 = vsel %vm540, %v1194, 0.0
        %1263 = vadd.xlane.f32.xlu0 %v1262
        %v1264 = vpop.xlane.xlu0 %1263
        %v1265 = vsel %vm540, %v1199, 0.0
        %1266 = vadd.xlane.f32.xlu0 %v1265
        %v1267 = vpop.xlane.xlu0 %1266
        %v1268 = vsel %vm540, %v1204, 0.0
        %1269 = vadd.xlane.f32.xlu0 %v1268
        %v1270 = vpop.xlane.xlu0 %1269
        %v1271 = vsel %vm540, %v1209, 0.0
        %1272 = vadd.xlane.f32.xlu0 %v1271
        %v1273 = vpop.xlane.xlu0 %1272
        %v1274 = vsel %vm540, %v1214, 0.0
        %1275 = vadd.xlane.f32.xlu0 %v1274
        %v1276 = vpop.xlane.xlu0 %1275
        %v1277 = vsel %vm540, %v1219, 0.0
        %1278 = vadd.xlane.f32.xlu0 %v1277
        %v1279 = vpop.xlane.xlu0 %1278
        %v1280 = vsel %vm540, %v1224, 0.0
        %1281 = vadd.xlane.f32.xlu0 %v1280
        %v1282 = vpop.xlane.xlu0 %1281
        %v1283 = vsel %vm540, %v1229, 0.0
        %1284 = vadd.xlane.f32.xlu0 %v1283
        %v1285 = vpop.xlane.xlu0 %1284
        %v1286 = vsel %vm540, %v1234, 0.0
        %1287 = vadd.xlane.f32.xlu0 %v1286
        %v1288 = vpop.xlane.xlu0 %1287
        %v1289 = vsel %vm540, %v1239, 0.0
        %1290 = vadd.xlane.f32.xlu0 %v1289
        %v1291 = vpop.xlane.xlu0 %1290
        %v1292 = vsel %vm540, %v1244, 0.0
        %1293 = vadd.xlane.f32.xlu0 %v1292
        %v1294 = vpop.xlane.xlu0 %1293
        %v1295 = vmul.f32 %v1249, %v589
        %v1296 = vmul.f32 %v1252, %v589
        %v1297 = vmul.f32 %v1255, %v589
        %v1298 = vmul.f32 %v1258, %v589
        %v1299 = vmul.f32 %v1261, %v589
        %v1300 = vmul.f32 %v1264, %v589
        %v1301 = vmul.f32 %v1267, %v589
        %v1302 = vmul.f32 %v1270, %v589
        %v1303 = vmul.f32 %v1273, %v589
        %v1304 = vmul.f32 %v1276, %v589
        %v1305 = vmul.f32 %v1279, %v589
        %v1306 = vmul.f32 %v1282, %v589
        %v1307 = vmul.f32 %v1285, %v589
        %v1308 = vmul.f32 %v1288, %v589
        %v1309 = vmul.f32 %v1291, %v589
        %v1310 = vmul.f32 %v1294, %v589
        %v1311 = vmul.f32 %v1169, %v1169
        %v1312 = vmul.f32 %v1174, %v1174
        %v1313 = vmul.f32 %v1179, %v1179
        %v1314 = vmul.f32 %v1184, %v1184
        %v1315 = vmul.f32 %v1189, %v1189
        %v1316 = vmul.f32 %v1194, %v1194
        %v1317 = vmul.f32 %v1199, %v1199
        %v1318 = vmul.f32 %v1204, %v1204
        %v1319 = vmul.f32 %v1209, %v1209
        %v1320 = vmul.f32 %v1214, %v1214
        %v1321 = vmul.f32 %v1219, %v1219
        %v1322 = vmul.f32 %v1224, %v1224
        %v1323 = vmul.f32 %v1229, %v1229
        %v1324 = vmul.f32 %v1234, %v1234
        %v1325 = vmul.f32 %v1239, %v1239
        %v1326 = vmul.f32 %v1244, %v1244
        %v1327 = vsel %vm540, %v1311, 0.0
        %1328 = vadd.xlane.f32.xlu0 %v1327
        %v1329 = vpop.xlane.xlu0 %1328
        %v1330 = vsel %vm540, %v1312, 0.0
        %1331 = vadd.xlane.f32.xlu0 %v1330
        %v1332 = vpop.xlane.xlu0 %1331
        %v1333 = vsel %vm540, %v1313, 0.0
        %1334 = vadd.xlane.f32.xlu0 %v1333
        %v1335 = vpop.xlane.xlu0 %1334
        %v1336 = vsel %vm540, %v1314, 0.0
        %1337 = vadd.xlane.f32.xlu0 %v1336
        %v1338 = vpop.xlane.xlu0 %1337
        %v1339 = vsel %vm540, %v1315, 0.0
        %1340 = vadd.xlane.f32.xlu0 %v1339
        %v1341 = vpop.xlane.xlu0 %1340
        %v1342 = vsel %vm540, %v1316, 0.0
        %1343 = vadd.xlane.f32.xlu0 %v1342
        %v1344 = vpop.xlane.xlu0 %1343
        %v1345 = vsel %vm540, %v1317, 0.0
        %1346 = vadd.xlane.f32.xlu0 %v1345
        %v1347 = vpop.xlane.xlu0 %1346
        %v1348 = vsel %vm540, %v1318, 0.0
        %1349 = vadd.xlane.f32.xlu0 %v1348
        %v1350 = vpop.xlane.xlu0 %1349
        %v1351 = vsel %vm540, %v1319, 0.0
        %1352 = vadd.xlane.f32.xlu0 %v1351
        %v1353 = vpop.xlane.xlu0 %1352
        %v1354 = vsel %vm540, %v1320, 0.0
        %1355 = vadd.xlane.f32.xlu0 %v1354
        %v1356 = vpop.xlane.xlu0 %1355
        %v1357 = vsel %vm540, %v1321, 0.0
        %1358 = vadd.xlane.f32.xlu0 %v1357
        %v1359 = vpop.xlane.xlu0 %1358
        %v1360 = vsel %vm540, %v1322, 0.0
        %1361 = vadd.xlane.f32.xlu0 %v1360
        %v1362 = vpop.xlane.xlu0 %1361
        %v1363 = vsel %vm540, %v1323, 0.0
        %1364 = vadd.xlane.f32.xlu0 %v1363
        %v1365 = vpop.xlane.xlu0 %1364
        %v1366 = vsel %vm540, %v1324, 0.0
        %1367 = vadd.xlane.f32.xlu0 %v1366
        %v1368 = vpop.xlane.xlu0 %1367
        %v1369 = vsel %vm540, %v1325, 0.0
        %1370 = vadd.xlane.f32.xlu0 %v1369
        %v1371 = vpop.xlane.xlu0 %1370
        %v1372 = vsel %vm540, %v1326, 0.0
        %1373 = vadd.xlane.f32.xlu0 %v1372
        %v1374 = vpop.xlane.xlu0 %1373
        %v1375 = vmul.f32 %v1329, %v589
        %v1376 = vmul.f32 %v1332, %v589
        %v1377 = vmul.f32 %v1335, %v589
        %v1378 = vmul.f32 %v1338, %v589
        %v1379 = vmul.f32 %v1341, %v589
        %v1380 = vmul.f32 %v1344, %v589
        %v1381 = vmul.f32 %v1347, %v589
        %v1382 = vmul.f32 %v1350, %v589
        %v1383 = vmul.f32 %v1353, %v589
        %v1384 = vmul.f32 %v1356, %v589
        %v1385 = vmul.f32 %v1359, %v589
        %v1386 = vmul.f32 %v1362, %v589
        %v1387 = vmul.f32 %v1365, %v589
        %v1388 = vmul.f32 %v1368, %v589
        %v1389 = vmul.f32 %v1371, %v589
        %v1390 = vmul.f32 %v1374, %v589
        %v1391 = vmul.f32 %v1295, %v1295
        %v1392 = vmul.f32 %v1296, %v1296
        %v1393 = vmul.f32 %v1297, %v1297
        %v1394 = vmul.f32 %v1298, %v1298
        %v1395 = vmul.f32 %v1299, %v1299
        %v1396 = vmul.f32 %v1300, %v1300
        %v1397 = vmul.f32 %v1301, %v1301
        %v1398 = vmul.f32 %v1302, %v1302
        %v1399 = vmul.f32 %v1303, %v1303
        %v1400 = vmul.f32 %v1304, %v1304
        %v1401 = vmul.f32 %v1305, %v1305
        %v1402 = vmul.f32 %v1306, %v1306
        %v1403 = vmul.f32 %v1307, %v1307
        %v1404 = vmul.f32 %v1308, %v1308
        %v1405 = vmul.f32 %v1309, %v1309
        %v1406 = vmul.f32 %v1310, %v1310
        %v1407 = vsub.f32 %v1375, %v1391
        %v1408 = vsub.f32 %v1376, %v1392
        %v1409 = vsub.f32 %v1377, %v1393
        %v1410 = vsub.f32 %v1378, %v1394
        %v1411 = vsub.f32 %v1379, %v1395
        %v1412 = vsub.f32 %v1380, %v1396
        %v1413 = vsub.f32 %v1381, %v1397
        %v1414 = vsub.f32 %v1382, %v1398
        %v1415 = vsub.f32 %v1383, %v1399
        %v1416 = vsub.f32 %v1384, %v1400
        %v1417 = vsub.f32 %v1385, %v1401
        %v1418 = vsub.f32 %v1386, %v1402
        %v1419 = vsub.f32 %v1387, %v1403
        %v1420 = vsub.f32 %v1388, %v1404
        %v1421 = vsub.f32 %v1389, %v1405
        %v1422 = vsub.f32 %v1390, %v1406
        %v1423 = vmax.f32 %v1407, 0.0
        %v1424 = vmax.f32 %v1408, 0.0
        %v1425 = vmax.f32 %v1409, 0.0
        %v1426 = vmax.f32 %v1410, 0.0
        %v1427 = vmax.f32 %v1411, 0.0
        %v1428 = vmax.f32 %v1412, 0.0
        %v1429 = vmax.f32 %v1413, 0.0
        %v1430 = vmax.f32 %v1414, 0.0
        %v1431 = vmax.f32 %v1415, 0.0
        %v1432 = vmax.f32 %v1416, 0.0
        %v1433 = vmax.f32 %v1417, 0.0
        %v1434 = vmax.f32 %v1418, 0.0
        %v1435 = vmax.f32 %v1419, 0.0
        %v1436 = vmax.f32 %v1420, 0.0
        %v1437 = vmax.f32 %v1421, 0.0
        %v1438 = vmax.f32 %v1422, 0.0
        %v1439 = vadd.f32 %v1423, 1e-05
        %v1440 = vadd.f32 %v1424, 1e-05
        %v1441 = vadd.f32 %v1425, 1e-05
        %v1442 = vadd.f32 %v1426, 1e-05
        %v1443 = vadd.f32 %v1427, 1e-05
        %v1444 = vadd.f32 %v1428, 1e-05
        %v1445 = vadd.f32 %v1429, 1e-05
        %v1446 = vadd.f32 %v1430, 1e-05
        %v1447 = vadd.f32 %v1431, 1e-05
        %v1448 = vadd.f32 %v1432, 1e-05
        %v1449 = vadd.f32 %v1433, 1e-05
        %v1450 = vadd.f32 %v1434, 1e-05
        %v1451 = vadd.f32 %v1435, 1e-05
        %v1452 = vadd.f32 %v1436, 1e-05
        %v1453 = vadd.f32 %v1437, 1e-05
        %v1454 = vadd.f32 %v1438, 1e-05
        %v1455 = vrsqrt.pop %v1439
        %v1456 = vrsqrt.pop %v1440
        %v1457 = vrsqrt.pop %v1441
        %v1458 = vrsqrt.pop %v1442
        %v1459 = vrsqrt.pop %v1443
        %v1460 = vrsqrt.pop %v1444
        %v1461 = vrsqrt.pop %v1445
        %v1462 = vrsqrt.pop %v1446
        %v1463 = vrsqrt.pop %v1447
        %v1464 = vrsqrt.pop %v1448
        %v1465 = vrsqrt.pop %v1449
        %v1466 = vrsqrt.pop %v1450
        %v1467 = vrsqrt.pop %v1451
        %v1468 = vrsqrt.pop %v1452
        %v1469 = vrsqrt.pop %v1453
        %v1470 = vrsqrt.pop %v1454
        %v1471 = vmul.f32 %v524, %v1455
        %v1472 = vmul.f32 %v525, %v1456
        %v1473 = vmul.f32 %v526, %v1457
        %v1474 = vmul.f32 %v527, %v1458
        %v1475 = vmul.f32 %v528, %v1459
        %v1476 = vmul.f32 %v529, %v1460
        %v1477 = vmul.f32 %v530, %v1461
        %v1478 = vmul.f32 %v531, %v1462
        %v1479 = vmul.f32 %v532, %v1463
        %v1480 = vmul.f32 %v533, %v1464
        %v1481 = vmul.f32 %v534, %v1465
        %v1482 = vmul.f32 %v535, %v1466
        %v1483 = vmul.f32 %v536, %v1467
        %v1484 = vmul.f32 %v537, %v1468
        %v1485 = vmul.f32 %v538, %v1469
        %v1486 = vmul.f32 %v539, %v1470
        %1488 = vset.pattern.permute.xlu0 2
        %1489 = vperm.xlu0 %1488, %v1471
        %v1490 = vpop.permute.xlu0 %1489
        %1493 = vset.pattern.permute.xlu0 2
        %1494 = vperm.xlu0 %1493, %v1472
        %v1495 = vpop.permute.xlu0 %1494
        %1498 = vset.pattern.permute.xlu0 2
        %1499 = vperm.xlu0 %1498, %v1473
        %v1500 = vpop.permute.xlu0 %1499
        %1503 = vset.pattern.permute.xlu0 2
        %1504 = vperm.xlu0 %1503, %v1474
        %v1505 = vpop.permute.xlu0 %1504
        %1508 = vset.pattern.permute.xlu0 2
        %1509 = vperm.xlu0 %1508, %v1475
        %v1510 = vpop.permute.xlu0 %1509
        %1513 = vset.pattern.permute.xlu0 2
        %1514 = vperm.xlu0 %1513, %v1476
        %v1515 = vpop.permute.xlu0 %1514
        %1518 = vset.pattern.permute.xlu0 2
        %1519 = vperm.xlu0 %1518, %v1477
        %v1520 = vpop.permute.xlu0 %1519
        %1523 = vset.pattern.permute.xlu0 2
        %1524 = vperm.xlu0 %1523, %v1478
        %v1525 = vpop.permute.xlu0 %1524
        %1528 = vset.pattern.permute.xlu0 2
        %1529 = vperm.xlu0 %1528, %v1479
        %v1530 = vpop.permute.xlu0 %1529
        %1533 = vset.pattern.permute.xlu0 2
        %1534 = vperm.xlu0 %1533, %v1480
        %v1535 = vpop.permute.xlu0 %1534
        %1538 = vset.pattern.permute.xlu0 2
        %1539 = vperm.xlu0 %1538, %v1481
        %v1540 = vpop.permute.xlu0 %1539
        %1543 = vset.pattern.permute.xlu0 2
        %1544 = vperm.xlu0 %1543, %v1482
        %v1545 = vpop.permute.xlu0 %1544
        %1548 = vset.pattern.permute.xlu0 2
        %1549 = vperm.xlu0 %1548, %v1483
        %v1550 = vpop.permute.xlu0 %1549
        %1553 = vset.pattern.permute.xlu0 2
        %1554 = vperm.xlu0 %1553, %v1484
        %v1555 = vpop.permute.xlu0 %1554
        %1558 = vset.pattern.permute.xlu0 2
        %1559 = vperm.xlu0 %1558, %v1485
        %v1560 = vpop.permute.xlu0 %1559
        %1563 = vset.pattern.permute.xlu0 2
        %1564 = vperm.xlu0 %1563, %v1486
        %v1565 = vpop.permute.xlu0 %1564
        %v1567 = vmul.f32 %v1169, %v1490
        %v1568 = vmul.f32 %v1174, %v1495
        %v1569 = vmul.f32 %v1179, %v1500
        %v1570 = vmul.f32 %v1184, %v1505
        %v1571 = vmul.f32 %v1189, %v1510
        %v1572 = vmul.f32 %v1194, %v1515
        %v1573 = vmul.f32 %v1199, %v1520
        %v1574 = vmul.f32 %v1204, %v1525
        %v1575 = vmul.f32 %v1209, %v1530
        %v1576 = vmul.f32 %v1214, %v1535
        %v1577 = vmul.f32 %v1219, %v1540
        %v1578 = vmul.f32 %v1224, %v1545
        %v1579 = vmul.f32 %v1229, %v1550
        %v1580 = vmul.f32 %v1234, %v1555
        %v1581 = vmul.f32 %v1239, %v1560
        %v1582 = vmul.f32 %v1244, %v1565
        %v1583 = vmul.f32 %v1295, %v1471
        %v1584 = vmul.f32 %v1296, %v1472
        %v1585 = vmul.f32 %v1297, %v1473
        %v1586 = vmul.f32 %v1298, %v1474
        %v1587 = vmul.f32 %v1299, %v1475
        %v1588 = vmul.f32 %v1300, %v1476
        %v1589 = vmul.f32 %v1301, %v1477
        %v1590 = vmul.f32 %v1302, %v1478
        %v1591 = vmul.f32 %v1303, %v1479
        %v1592 = vmul.f32 %v1304, %v1480
        %v1593 = vmul.f32 %v1305, %v1481
        %v1594 = vmul.f32 %v1306, %v1482
        %v1595 = vmul.f32 %v1307, %v1483
        %v1596 = vmul.f32 %v1308, %v1484
        %v1597 = vmul.f32 %v1309, %v1485
        %v1598 = vmul.f32 %v1310, %v1486
        %1615 = vrot.lane.b32.xlu0 %v1583, 1
        %v1616 = vpop.permute.xlu0 %1615
        %1617 = vrot.lane.b32.xlu0 %v1584, 1
        %v1618 = vpop.permute.xlu0 %1617
        %1619 = vrot.lane.b32.xlu0 %v1585, 1
        %v1620 = vpop.permute.xlu0 %1619
        %1621 = vrot.lane.b32.xlu0 %v1586, 1
        %v1622 = vpop.permute.xlu0 %1621
        %1623 = vrot.lane.b32.xlu0 %v1587, 1
        %v1624 = vpop.permute.xlu0 %1623
        %1625 = vrot.lane.b32.xlu0 %v1588, 1
        %v1626 = vpop.permute.xlu0 %1625
        %1627 = vrot.lane.b32.xlu0 %v1589, 1
        %v1628 = vpop.permute.xlu0 %1627
        %1629 = vrot.lane.b32.xlu0 %v1590, 1
        %v1630 = vpop.permute.xlu0 %1629
        %1631 = vrot.lane.b32.xlu0 %v1591, 1
        %v1632 = vpop.permute.xlu0 %1631
        %1633 = vrot.lane.b32.xlu0 %v1592, 1
        %v1634 = vpop.permute.xlu0 %1633
        %1635 = vrot.lane.b32.xlu0 %v1593, 1
        %v1636 = vpop.permute.xlu0 %1635
        %1637 = vrot.lane.b32.xlu0 %v1594, 1
        %v1638 = vpop.permute.xlu0 %1637
        %1639 = vrot.lane.b32.xlu0 %v1595, 1
        %v1640 = vpop.permute.xlu0 %1639
        %1641 = vrot.lane.b32.xlu0 %v1596, 1
        %v1642 = vpop.permute.xlu0 %1641
        %1643 = vrot.lane.b32.xlu0 %v1597, 1
        %v1644 = vpop.permute.xlu0 %1643
        %1645 = vrot.lane.b32.xlu0 %v1598, 1
        %v1646 = vpop.permute.xlu0 %1645
        %v1663 = vsub.f32 %v524, %v1616
        %v1664 = vsub.f32 %v525, %v1618
        %v1665 = vsub.f32 %v526, %v1620
        %v1666 = vsub.f32 %v527, %v1622
        %v1667 = vsub.f32 %v528, %v1624
        %v1668 = vsub.f32 %v529, %v1626
        %v1669 = vsub.f32 %v530, %v1628
        %v1670 = vsub.f32 %v531, %v1630
        %v1671 = vsub.f32 %v532, %v1632
        %v1672 = vsub.f32 %v533, %v1634
        %v1673 = vsub.f32 %v534, %v1636
        %v1674 = vsub.f32 %v535, %v1638
        %v1675 = vsub.f32 %v536, %v1640
        %v1676 = vsub.f32 %v537, %v1642
        %v1677 = vsub.f32 %v538, %v1644
        %v1678 = vsub.f32 %v539, %v1646
        %1680 = vset.pattern.permute.xlu0 3
        %1681 = vperm.xlu0 %1680, %v1663
        %v1682 = vpop.permute.xlu0 %1681
        %1685 = vset.pattern.permute.xlu0 3
        %1686 = vperm.xlu0 %1685, %v1664
        %v1687 = vpop.permute.xlu0 %1686
        %1690 = vset.pattern.permute.xlu0 3
        %1691 = vperm.xlu0 %1690, %v1665
        %v1692 = vpop.permute.xlu0 %1691
        %1695 = vset.pattern.permute.xlu0 3
        %1696 = vperm.xlu0 %1695, %v1666
        %v1697 = vpop.permute.xlu0 %1696
        %1700 = vset.pattern.permute.xlu0 3
        %1701 = vperm.xlu0 %1700, %v1667
        %v1702 = vpop.permute.xlu0 %1701
        %1705 = vset.pattern.permute.xlu0 3
        %1706 = vperm.xlu0 %1705, %v1668
        %v1707 = vpop.permute.xlu0 %1706
        %1710 = vset.pattern.permute.xlu0 3
        %1711 = vperm.xlu0 %1710, %v1669
        %v1712 = vpop.permute.xlu0 %1711
        %1715 = vset.pattern.permute.xlu0 3
        %1716 = vperm.xlu0 %1715, %v1670
        %v1717 = vpop.permute.xlu0 %1716
        %1720 = vset.pattern.permute.xlu0 3
        %1721 = vperm.xlu0 %1720, %v1671
        %v1722 = vpop.permute.xlu0 %1721
        %1725 = vset.pattern.permute.xlu0 3
        %1726 = vperm.xlu0 %1725, %v1672
        %v1727 = vpop.permute.xlu0 %1726
        %1730 = vset.pattern.permute.xlu0 3
        %1731 = vperm.xlu0 %1730, %v1673
        %v1732 = vpop.permute.xlu0 %1731
        %1735 = vset.pattern.permute.xlu0 3
        %1736 = vperm.xlu0 %1735, %v1674
        %v1737 = vpop.permute.xlu0 %1736
        %1740 = vset.pattern.permute.xlu0 3
        %1741 = vperm.xlu0 %1740, %v1675
        %v1742 = vpop.permute.xlu0 %1741
        %1745 = vset.pattern.permute.xlu0 3
        %1746 = vperm.xlu0 %1745, %v1676
        %v1747 = vpop.permute.xlu0 %1746
        %1750 = vset.pattern.permute.xlu0 3
        %1751 = vperm.xlu0 %1750, %v1677
        %v1752 = vpop.permute.xlu0 %1751
        %1755 = vset.pattern.permute.xlu0 3
        %1756 = vperm.xlu0 %1755, %v1678
        %v1757 = vpop.permute.xlu0 %1756
        %v1759 = vadd.f32 %v1567, %v1682
        %v1760 = vadd.f32 %v1568, %v1687
        %v1761 = vadd.f32 %v1569, %v1692
        %v1762 = vadd.f32 %v1570, %v1697
        %v1763 = vadd.f32 %v1571, %v1702
        %v1764 = vadd.f32 %v1572, %v1707
        %v1765 = vadd.f32 %v1573, %v1712
        %v1766 = vadd.f32 %v1574, %v1717
        %v1767 = vadd.f32 %v1575, %v1722
        %v1768 = vadd.f32 %v1576, %v1727
        %v1769 = vadd.f32 %v1577, %v1732
        %v1770 = vadd.f32 %v1578, %v1737
        %v1771 = vadd.f32 %v1579, %v1742
        %v1772 = vadd.f32 %v1580, %v1747
        %v1773 = vadd.f32 %v1581, %v1752
        %v1774 = vadd.f32 %v1582, %v1757
        %v1775 = vmax.f32 %v1759, 0.0
        %v1776 = vmax.f32 %v1760, 0.0
        %v1777 = vmax.f32 %v1761, 0.0
        %v1778 = vmax.f32 %v1762, 0.0
        %v1779 = vmax.f32 %v1763, 0.0
        %v1780 = vmax.f32 %v1764, 0.0
        %v1781 = vmax.f32 %v1765, 0.0
        %v1782 = vmax.f32 %v1766, 0.0
        %v1783 = vmax.f32 %v1767, 0.0
        %v1784 = vmax.f32 %v1768, 0.0
        %v1785 = vmax.f32 %v1769, 0.0
        %v1786 = vmax.f32 %v1770, 0.0
        %v1787 = vmax.f32 %v1771, 0.0
        %v1788 = vmax.f32 %v1772, 0.0
        %v1789 = vmax.f32 %v1773, 0.0
        %v1790 = vmax.f32 %v1774, 0.0
        %1792 = vset.pattern.permute.xlu0 4
        %1793 = vperm.xlu0 %1792, %v524
        %v1794 = vpop.permute.xlu0 %1793
        %1797 = vset.pattern.permute.xlu0 4
        %1798 = vperm.xlu0 %1797, %v525
        %v1799 = vpop.permute.xlu0 %1798
        %1802 = vset.pattern.permute.xlu0 4
        %1803 = vperm.xlu0 %1802, %v526
        %v1804 = vpop.permute.xlu0 %1803
        %1807 = vset.pattern.permute.xlu0 4
        %1808 = vperm.xlu0 %1807, %v527
        %v1809 = vpop.permute.xlu0 %1808
        %1812 = vset.pattern.permute.xlu0 4
        %1813 = vperm.xlu0 %1812, %v528
        %v1814 = vpop.permute.xlu0 %1813
        %1817 = vset.pattern.permute.xlu0 4
        %1818 = vperm.xlu0 %1817, %v529
        %v1819 = vpop.permute.xlu0 %1818
        %1822 = vset.pattern.permute.xlu0 4
        %1823 = vperm.xlu0 %1822, %v530
        %v1824 = vpop.permute.xlu0 %1823
        %1827 = vset.pattern.permute.xlu0 4
        %1828 = vperm.xlu0 %1827, %v531
        %v1829 = vpop.permute.xlu0 %1828
        %1832 = vset.pattern.permute.xlu0 4
        %1833 = vperm.xlu0 %1832, %v532
        %v1834 = vpop.permute.xlu0 %1833
        %1837 = vset.pattern.permute.xlu0 4
        %1838 = vperm.xlu0 %1837, %v533
        %v1839 = vpop.permute.xlu0 %1838
        %1842 = vset.pattern.permute.xlu0 4
        %1843 = vperm.xlu0 %1842, %v534
        %v1844 = vpop.permute.xlu0 %1843
        %1847 = vset.pattern.permute.xlu0 4
        %1848 = vperm.xlu0 %1847, %v535
        %v1849 = vpop.permute.xlu0 %1848
        %1852 = vset.pattern.permute.xlu0 4
        %1853 = vperm.xlu0 %1852, %v536
        %v1854 = vpop.permute.xlu0 %1853
        %1857 = vset.pattern.permute.xlu0 4
        %1858 = vperm.xlu0 %1857, %v537
        %v1859 = vpop.permute.xlu0 %1858
        %1862 = vset.pattern.permute.xlu0 4
        %1863 = vperm.xlu0 %1862, %v538
        %v1864 = vpop.permute.xlu0 %1863
        %1867 = vset.pattern.permute.xlu0 4
        %1868 = vperm.xlu0 %1867, %v539
        %v1869 = vpop.permute.xlu0 %1868
        %v1871 = vmul.f32 %v1775, %v1794
        %v1872 = vmul.f32 %v1776, %v1799
        %v1873 = vmul.f32 %v1777, %v1804
        %v1874 = vmul.f32 %v1778, %v1809
        %v1875 = vmul.f32 %v1779, %v1814
        %v1876 = vmul.f32 %v1780, %v1819
        %v1877 = vmul.f32 %v1781, %v1824
        %v1878 = vmul.f32 %v1782, %v1829
        %v1879 = vmul.f32 %v1783, %v1834
        %v1880 = vmul.f32 %v1784, %v1839
        %v1881 = vmul.f32 %v1785, %v1844
        %v1882 = vmul.f32 %v1786, %v1849
        %v1883 = vmul.f32 %v1787, %v1854
        %v1884 = vmul.f32 %v1788, %v1859
        %v1885 = vmul.f32 %v1789, %v1864
        %v1886 = vmul.f32 %v1790, %v1869
        %v1887 = vsel %vm540, %v1871, 0.0
        %v1888 = vsel %vm540, %v1872, 0.0
        %v1889 = vadd.f32 %v1887, %v1888
        %v1890 = vsel %vm540, %v1873, 0.0
        %v1891 = vadd.f32 %v1889, %v1890
        %v1892 = vsel %vm540, %v1874, 0.0
        %v1893 = vadd.f32 %v1891, %v1892
        %v1894 = vsel %vm540, %v1875, 0.0
        %v1895 = vadd.f32 %v1893, %v1894
        %v1896 = vsel %vm540, %v1876, 0.0
        %v1897 = vadd.f32 %v1895, %v1896
        %v1898 = vsel %vm540, %v1877, 0.0
        %v1899 = vadd.f32 %v1897, %v1898
        %v1900 = vsel %vm540, %v1878, 0.0
        %v1901 = vadd.f32 %v1899, %v1900
        %v1902 = vsel %vm540, %v1879, 0.0
        %v1903 = vadd.f32 %v1901, %v1902
        %v1904 = vsel %vm540, %v1880, 0.0
        %v1905 = vadd.f32 %v1903, %v1904
        %v1906 = vsel %vm540, %v1881, 0.0
        %v1907 = vadd.f32 %v1905, %v1906
        %v1908 = vsel %vm540, %v1882, 0.0
        %v1909 = vadd.f32 %v1907, %v1908
        %v1910 = vsel %vm540, %v1883, 0.0
        %v1911 = vadd.f32 %v1909, %v1910
        %v1912 = vsel %vm540, %v1884, 0.0
        %v1913 = vadd.f32 %v1911, %v1912
        %v1914 = vsel %vm540, %v1885, 0.0
        %v1915 = vadd.f32 %v1913, %v1914
        %v1916 = vsel %vm540, %v1886, 0.0
        %v1917 = vadd.f32 %v1915, %v1916
        %v1918 = vrot.slane %v1917, 4
        %v1919 = vadd.f32 %v1917, %v1918
        %v1920 = vrot.slane %v1919, 2
        %v1921 = vadd.f32 %v1919, %v1920
        %v1922 = vrot.slane %v1921, 1
        %v1923 = vadd.f32 %v1921, %v1922
        %1924 = vset.pattern.permute.xlu0 5
        %1925 = vperm.xlu0 %1924, %v524
        %v1926 = vpop.permute.xlu0 %1925
        %v1928 = vadd.f32 %v1923, %v1926
        %vm1929 = vcmask 57344
        %1930 = vst.msk [vmem:[%s162] sm:$0x1] %vm1929, %v1928
        %s1931 = sand.u32 %s93, 1
        %s1932 = scalar_lea.sflag [#allocation3], %s1931
        %s1933 = sand.u32 %s93, 1
        %s1934 = scalar_lea.vmem [#allocation2], %s1933
        // Predicated region
        $region33: #{tpu_custom_call.1} parent=31 // pred_check
          %p1935 = pneg %p103
        $region34: #{tpu_custom_call.1} parent=31 // pred_check_branch
          %1937 = sbr.rel (%p1935) target = $region36
        $region35: #{tpu_custom_call.1} parent=31 // pred_region
          %s1939 = ssub.s32 16, 16
          %1940 = vsyncadd %s1932, %s1939
          %s1941 = smul.addr %s17, 16
          %s1942 = scalar_lea.hbm %s3, %s1941
          %s1944 = sshll.u32 %s1934, 4
          %s1945 = int_to_ptr.vmem [resolvable:$true] %s1944
          %1947 = dma.vmem_to_hbm [thread:$0]  %s1945, 16, %s1942, %s1932
        $region36: #{tpu_custom_call.1} parent=31 // pred_fallthru
          _
      $region32: #{tpu_custom_call.1} parent=5 // pred_fallthru
        _
      %p1948 = scmp.le.s32.totalorder 2, %s12
      // Predicated region
      $region37: #{tpu_custom_call.1} parent=5 // pred_check
        %p1949 = pneg %p1948
      $region38: #{tpu_custom_call.1} parent=5 // pred_check_branch
        %1951 = sbr.rel (%p1949) target = $region40
      $region39: #{tpu_custom_call.1} parent=5 // pred_region
        %s1952 = ssub.s32 %s12, 2
        // Predicated region
        $region41: #{tpu_custom_call.1} parent=39 // pred_check
          %p1953 = pneg %p109
        $region42: #{tpu_custom_call.1} parent=39 // pred_check_branch
          %1955 = sbr.rel (%p1953) target = $region44
        $region43: #{tpu_custom_call.1} parent=39 // pred_region
          %s1956 = sand.u32 %s94, 1
          %s1957 = scalar_lea.sflag [#allocation3], %s1956
          %s1958 = sand.u32 %s94, 1
          %s1959 = scalar_lea.vmem [#allocation2], %s1958
          %1960 = dma.done %s1957, 16
        $region44: #{tpu_custom_call.1} parent=39 // pred_fallthru
          _
      $region40: #{tpu_custom_call.1} parent=5 // pred_fallthru
        _
    $region6: #{tpu_custom_call.1} parent=1 // loop_footer
      %s16 = sadd.s32 1, %s12
    $region7: #{tpu_custom_call.1} parent=1 // loop_footer_branch
      %11 = sbr.rel target = $region3
    $region8: #{tpu_custom_call.1} parent=1 // loop_exit
      _
    %1961 = vsyncpa [#allocation3], 1
    %s1962 = scalar_lea.sflag [#allocation3], 1
    %1963 = vsyncpa %s1962, 1

</llo_original>
